<compile_context>
chip_gen: v5e
topology: v5e:2x2
jax: 0.10.0
libtpu: 0.0.40
codegen_flags: <defaults>
</compile_context>

<pallas_src>
import math
import functools

import jax
import jax.numpy as jnp
from jax.experimental import pallas as pl
from jax.experimental.pallas import tpu as pltpu


def _vmem_limit_bytes():
    # v5e/v6e have 128 MiB physical VMEM, v7x only 64 MiB — budget per chip
    # instead of hard-coding the v7x-safe value everywhere.
    try:
        cap = getattr(pltpu.get_tpu_info(), "vmem_capacity_bytes", None)
        if cap:
            return min(int(cap) * 3 // 4, 100 * 1024 * 1024)
    except Exception:
        pass
    return 48 * 1024 * 1024


_VMEM_LIMIT = _vmem_limit_bytes()


# ----------------------------------------------------------------------------
# Pallas kernels
# ----------------------------------------------------------------------------
def _mm_kernel(x_ref, w_ref, b_ref, *rest):
    if len(rest) == 2:
        res_ref, o_ref = rest
    else:
        (o_ref,) = rest
        res_ref = None
    x = x_ref[...].astype(jnp.bfloat16)                   # no-op when already bf16
    y = jnp.dot(x, w_ref[...], preferred_element_type=jnp.float32) + b_ref[...]
    if res_ref is not None:
        y = y + res_ref[...].astype(jnp.float32)          # fused residual add
    o_ref[...] = y.astype(o_ref.dtype)


def matmul_bias(x, w, b, res=None, out_dtype=jnp.bfloat16):
    """y = x @ w + b (+ res).  bf16 MXU operands, f32 accumulation.
    No M padding: pl.cdiv grid; partial last-block rows read garbage and their
    writes are dropped (safe because K is never tiled)."""
    M, K = x.shape
    N = w.shape[1]
    if M >= 1024:
        TM = 512
    elif M >= 512:
        TM = 256          # keeps >=2 M blocks for v7x's two TensorCores
    elif M >= 128:
        TM = 128
    else:
        TM = M
    # TODO(synk): when N < 128 (toy channel counts) the store is lane-sparse
    # (masked vst); real configs should use 128-multiple channel counts.
    TN = 128 if (N % 128 == 0) else N
    grid = (pl.cdiv(M, TM), N // TN)

    in_specs = [pl.BlockSpec((TM, K), lambda i, j: (i, 0)),
                pl.BlockSpec((K, TN), lambda i, j: (0, j)),
                pl.BlockSpec((1, TN), lambda i, j: (0, j))]
    args = [x, w.astype(jnp.bfloat16), b.reshape(1, N).astype(jnp.float32)]
    if res is not None:
        in_specs.append(pl.BlockSpec((TM, TN), lambda i, j: (i, j)))
        args.append(res)

    cost = pl.CostEstimate(
        flops=int(2 * M * K * N), transcendentals=0,
        bytes_accessed=int(M * K * x.dtype.itemsize + K * N * 2
                           + M * N * jnp.dtype(out_dtype).itemsize))
    return pl.pallas_call(
        _mm_kernel,
        out_shape=jax.ShapeDtypeStruct((M, N), out_dtype),
        grid=grid,
        in_specs=in_specs,
        out_specs=pl.BlockSpec((TM, TN), lambda i, j: (i, j)),
        compiler_params=pltpu.CompilerParams(
            dimension_semantics=("parallel", "parallel"),
            vmem_limit_bytes=_VMEM_LIMIT),
        cost_estimate=cost,
    )(*args)


def _conv3x3_kernel(x_ref, w_ref, b_ref, *rest, H, W, fuse):
    """Fused 3x3 conv, stride 1, pad 1.  fuse=True: one K=9C MXU dot against an
    in-VMEM bf16 im2col slab.  fuse=False (tiny Cin): per-tap dots."""
    if len(rest) == 2:
        res_ref, o_ref = rest
    else:
        (o_ref,) = rest
        res_ref = None
    C = x_ref.shape[-1]
    tn = o_ref.shape[-1]
    if fuse:
        taps = [x_ref[0, ky:ky + H, kx:kx + W, :].reshape(H * W, C).astype(jnp.bfloat16)
                for ky in range(3) for kx in range(3)]
        slab = jnp.concatenate(taps, axis=-1)              # (H*W, 9C) bf16, VMEM only
        acc = jnp.dot(slab, w_ref[...], preferred_element_type=jnp.float32)
    else:
        w = w_ref[...]                                     # already bf16
        acc = None
        for ky in range(3):
            for kx in range(3):
                tap = ky * 3 + kx
                patch = x_ref[0, ky:ky + H, kx:kx + W, :].reshape(H * W, C)
                d = jnp.dot(patch.astype(jnp.bfloat16), w[tap * C:(tap + 1) * C, :],
                            preferred_element_type=jnp.float32)
                acc = d if acc is None else acc + d        # init from first tap
    y = (acc + b_ref[...]).reshape(H, W, tn)
    if res_ref is not None:
        y = y + res_ref[0].astype(jnp.float32)             # fused residual add
    o_ref[0] = y.astype(o_ref.dtype)


def conv3x3(x, w, b, res=None, out_dtype=jnp.bfloat16):
    """3x3 conv, stride 1, padding 1.  x:(B,H,W,Cin) NHWC; w:(9*Cin,Cout) (ky,kx,cin).
    Optional fused residual add of res:(B,H,W,Cout)."""
    B, H, W, C = x.shape
    Cout = w.shape[1]
    xp = jnp.pad(x, ((0, 0), (1, 1), (1, 1), (0, 0)))      # halo pad only, no HBM im2col
    TN = 128 if (Cout % 128 == 0) else Cout
    grid = (B, Cout // TN)
    fuse = (C % 8 == 0)                                    # head conv (Cin=3) -> per-tap path

    in_specs = [pl.BlockSpec((1, H + 2, W + 2, C), lambda bi, ni: (bi, 0, 0, 0)),
                pl.BlockSpec((9 * C, TN), lambda bi, ni: (0, ni)),
                pl.BlockSpec((1, TN), lambda bi, ni: (0, ni))]
    args = [xp, w.astype(jnp.bfloat16), b.reshape(1, Cout).astype(jnp.float32)]
    if res is not None:
        in_specs.append(pl.BlockSpec((1, H, W, TN), lambda bi, ni: (bi, 0, 0, ni)))
        args.append(res)

    cost = pl.CostEstimate(
        flops=int(2 * B * H * W * 9 * C * Cout), transcendentals=0,
        bytes_accessed=int(xp.size * xp.dtype.itemsize + w.size * 2
                           + B * H * W * Cout * jnp.dtype(out_dtype).itemsize))
    # TODO(synk): for large H*W, tile the spatial dims with a halo DMA instead
    # of one full (H+2, W+2, C) block per batch element (v7x 64 MiB VMEM).
    return pl.pallas_call(
        functools.partial(_conv3x3_kernel, H=H, W=W, fuse=fuse),
        out_shape=jax.ShapeDtypeStruct((B, H, W, Cout), out_dtype),
        grid=grid,
        in_specs=in_specs,
        out_specs=pl.BlockSpec((1, H, W, TN), lambda bi, ni: (bi, 0, 0, ni)),
        compiler_params=pltpu.CompilerParams(
            dimension_semantics=("parallel", "parallel"),
            vmem_limit_bytes=_VMEM_LIMIT),
        cost_estimate=cost,
    )(*args)


def conv3x3_s2(x, w, b):
    """3x3 conv, stride 2, padding 1 (DownSample).  stride-2 output == stride-1
    output sampled at even pixels, so reuse the fused conv and subsample bf16."""
    # TODO(synk): fold the stride-2 phase selection into the kernel slab build
    # to skip the 4x extra MXU work + full-res store (DownSample is rare).
    return conv3x3(x, w, b)[:, ::2, ::2, :]


def conv1x1(x, w, b, res=None, out_dtype=jnp.bfloat16):
    B, H, W, C = x.shape
    r = None if res is None else res.reshape(B * H * W, -1)
    y = matmul_bias(x.reshape(B * H * W, C), w, b, res=r, out_dtype=out_dtype)
    return y.reshape(B, H, W, -1)


def _gn_kernel(x_ref, *refs, cnt, eps, swish, has_tbias):
    if has_tbias:
        tb_ref, oh_ref, ohT_ref, gamma_ref, beta_ref, o_ref = refs
    else:
        oh_ref, ohT_ref, gamma_ref, beta_ref, o_ref = refs
    x = x_ref[0].astype(jnp.float32)                       # stats in f32 (v5e: no bf16 VPU)
    if has_tbias:
        x = x + tb_ref[...]                                # fused temb bias (per batch, per C)
    oh = oh_ref[...]                                       # (C, G) one-hot group membership
    ohT = ohT_ref[...]                                     # (G, C)
    s = jnp.sum(x, axis=0, keepdims=True)                  # (1, C)
    mean_c = jnp.dot(jnp.dot(s, oh, preferred_element_type=jnp.float32) / cnt,
                     ohT, preferred_element_type=jnp.float32)            # (1, C)
    d = x - mean_c                                         # centered: better numerics
    ss = jnp.sum(d * d, axis=0, keepdims=True)             # (1, C)
    var_g = jnp.dot(ss, oh, preferred_element_type=jnp.float32) / cnt
    inv_c = jnp.dot(jax.lax.rsqrt(var_g + eps), ohT, preferred_element_type=jnp.float32)
    y = d * inv_c * gamma_ref[...] + beta_ref[...]
    if swish:
        y = y * jax.nn.sigmoid(y)
    o_ref[0] = y.astype(o_ref.dtype)


def group_norm(x, gamma, beta, *, groups, swish, tbias=None, eps=1e-5,
               out_dtype=jnp.bfloat16):
    """GroupNorm over NHWC input.  Optional fused Swish and per-batch additive
    bias (ResBlock temb projection) applied *before* the statistics."""
    # TODO(synk): for large H*W*C switch to a two-pass HW-tiled reduction; the
    # single full-block pass is used here because it comfortably fits VMEM.
    B, H, W, C = x.shape
    cpg = C // groups
    oh = (jnp.arange(C)[:, None] // cpg ==
          jnp.arange(groups)[None, :]).astype(jnp.float32)                # (C, G)
    x2 = x.reshape(B, H * W, C)
    has_tb = tbias is not None

    in_specs = [pl.BlockSpec((1, H * W, C), lambda b: (b, 0, 0))]
    args = [x2]
    if has_tb:
        in_specs.append(pl.BlockSpec((1, C), lambda b: (b, 0)))
        args.append(tbias.astype(jnp.float32))
    in_specs += [pl.BlockSpec((C, groups), lambda b: (0, 0)),
                 pl.BlockSpec((groups, C), lambda b: (0, 0)),
                 pl.BlockSpec((1, C), lambda b: (0, 0)),
                 pl.BlockSpec((1, C), lambda b: (0, 0))]
    args += [oh, oh.T, gamma.reshape(1, C), beta.reshape(1, C)]

    out = pl.pallas_call(
        functools.partial(_gn_kernel, cnt=float(H * W * cpg), eps=eps,
                          swish=swish, has_tbias=has_tb),
        out_shape=jax.ShapeDtypeStruct((B, H * W, C), out_dtype),
        grid=(B,),
        in_specs=in_specs,
        out_specs=pl.BlockSpec((1, H * W, C), lambda b: (b, 0, 0)),
        compiler_params=pltpu.CompilerParams(
            dimension_semantics=("parallel",),
            vmem_limit_bytes=_VMEM_LIMIT),
    )(*args)
    return out.reshape(B, H, W, C)


def _flash_kernel(q_ref, k_ref, v_ref, o_ref, m_sc, l_sc, acc_sc):
    # Attention scale is pre-folded into the q projection weights.
    ki = pl.program_id(2)

    @pl.when(ki == 0)
    def _():
        m_sc[...] = jnp.full_like(m_sc, -jnp.inf)
        l_sc[...] = jnp.zeros_like(l_sc)
        acc_sc[...] = jnp.zeros_like(acc_sc)

    q = q_ref[0]                                           # (TQ, C) bf16
    k = k_ref[0]                                           # (TK, C) bf16
    s = jnp.einsum('qd,kd->qk', q, k, preferred_element_type=jnp.float32)
    m_prev = m_sc[...]
    m_new = jnp.maximum(m_prev, jnp.max(s, axis=-1, keepdims=True))
    alpha = jnp.exp(m_prev - m_new)
    p = jnp.exp(s - m_new)
    l_sc[...] = alpha * l_sc[...] + jnp.sum(p, axis=-1, keepdims=True)
    acc_sc[...] = alpha * acc_sc[...] + jnp.dot(
        p.astype(jnp.bfloat16), v_ref[0], preferred_element_type=jnp.float32)
    m_sc[...] = m_new

    @pl.when(ki == pl.num_programs(2) - 1)
    def _():
        o_ref[0] = (acc_sc[...] *
                    pl.reciprocal(l_sc[...], approx=True)).astype(o_ref.dtype)


def attention(q, k, v):
    """out = softmax(q k^T) v (scale folded into q), online-softmax over KV tiles."""
    B, L, C = q.shape
    TQ = 128 if (L % 128 == 0) else L
    TK = 128 if (L % 128 == 0) else L
    grid = (B, L // TQ, L // TK)
    return pl.pallas_call(
        _flash_kernel,
        out_shape=jax.ShapeDtypeStruct((B, L, C), jnp.bfloat16),
        grid=grid,
        in_specs=[pl.BlockSpec((1, TQ, C), lambda b, qi, ki: (b, qi, 0)),
                  pl.BlockSpec((1, TK, C), lambda b, qi, ki: (b, ki, 0)),
                  pl.BlockSpec((1, TK, C), lambda b, qi, ki: (b, ki, 0))],
        out_specs=pl.BlockSpec((1, TQ, C), lambda b, qi, ki: (b, qi, 0)),
        scratch_shapes=[pltpu.VMEM((TQ, 1), jnp.float32),
                        pltpu.VMEM((TQ, 1), jnp.float32),
                        pltpu.VMEM((TQ, C), jnp.float32)],
        compiler_params=pltpu.CompilerParams(
            dimension_semantics=("parallel", "parallel", "arbitrary"),
            vmem_limit_bytes=_VMEM_LIMIT),
    )(q, k, v)


# ----------------------------------------------------------------------------
# Parameter construction (deterministic, synthetic — no checkpoint loading)
# ----------------------------------------------------------------------------
class KeyGen:
    def __init__(self, key):
        self.key = key

    def __call__(self):
        self.key, sub = jax.random.split(self.key)
        return sub


def conv3x3_init(kg, cin, cout, gain=1.0):
    s = gain / math.sqrt(9 * cin)
    w = jax.random.normal(kg(), (9 * cin, cout), jnp.float32) * s
    return w, jnp.zeros((cout,), jnp.float32)


def conv1x1_init(kg, cin, cout, gain=1.0):
    s = gain / math.sqrt(cin)
    w = jax.random.normal(kg(), (cin, cout), jnp.float32) * s
    return w, jnp.zeros((cout,), jnp.float32)


def linear_init(kg, fin, fout):
    s = 1.0 / math.sqrt(fin)
    w = jax.random.normal(kg(), (fin, fout), jnp.float32) * s
    return w, jnp.zeros((fout,), jnp.float32)


def gn_init(c):
    return jnp.ones((c,), jnp.float32), jnp.zeros((c,), jnp.float32)


def sinusoidal_table(T, d_model):
    assert d_model % 2 == 0
    e = jnp.arange(0, d_model, 2, dtype=jnp.float32) / d_model * math.log(10000.0)
    freq = jnp.exp(-e)
    pos = jnp.arange(T, dtype=jnp.float32)
    ang = pos[:, None] * freq[None, :]
    return jnp.stack([jnp.sin(ang), jnp.cos(ang)], axis=-1).reshape(T, d_model)


def resblock_init(kg, cin, cout, tdim, is_attn):
    p = {
        'gn1': gn_init(cin),
        'conv1': conv3x3_init(kg, cin, cout),
        'temb': linear_init(kg, tdim, cout),
        'gn2': gn_init(cout),
        'conv2': conv3x3_init(kg, cout, cout),
        'shortcut': conv1x1_init(kg, cin, cout) if cin != cout else None,
        'attn': None,
    }
    if is_attn:
        qw, qb = conv1x1_init(kg, cout, cout)
        scale = float(cout) ** -0.5
        p['attn'] = {
            'gn': gn_init(cout),
            # attention 1/sqrt(C) scale folded into the q projection (constant fold)
            'q': (qw * scale, qb * scale),
            'k': conv1x1_init(kg, cout, cout),
            'v': conv1x1_init(kg, cout, cout),
            'o': conv1x1_init(kg, cout, cout, gain=1e-5),
        }
    return p


def build_unet_params(kg, cfg):
    in_ch, base_ch = cfg['in_ch'], cfg['base_ch']
    ch_mult, attn_list = cfg['ch_mult'], cfg['attn_list']
    n_res, tdim, T = cfg['n_res_block'], cfg['tdim'], cfg['T']
    assert all(i < len(ch_mult) for i in attn_list), 'attn index out of bound'

    p = {
        'temb_table': sinusoidal_table(T, base_ch),
        'temb_l1': linear_init(kg, base_ch, tdim),
        'temb_l2': linear_init(kg, tdim, tdim),
        'head': conv3x3_init(kg, in_ch, base_ch),
    }

    down = []
    chs = [base_ch]
    now = base_ch
    for i, mult in enumerate(ch_mult):
        out_ch = base_ch * mult
        for _ in range(n_res):
            down.append(('res', resblock_init(kg, now, out_ch, tdim, i in attn_list)))
            now = out_ch
            chs.append(now)
        if i != len(ch_mult) - 1:
            down.append(('down', conv3x3_init(kg, now, now)))
            chs.append(now)
    p['down'] = down

    p['middle'] = [resblock_init(kg, now, now, tdim, True),
                   resblock_init(kg, now, now, tdim, False)]

    up = []
    for idx, mult in reversed(list(enumerate(ch_mult))):
        out_ch = base_ch * mult
        for _ in range(n_res + 1):
            up.append(('res', resblock_init(kg, chs.pop() + now, out_ch, tdim,
                                            idx in attn_list)))
            now = out_ch
        if idx != 0:
            up.append(('up', conv3x3_init(kg, now, now)))
    assert len(chs) == 0
    p['up'] = up

    p['tail_gn'] = gn_init(now)
    p['tail_conv'] = conv3x3_init(kg, now, 3, gain=1e-5)
    return p


# ----------------------------------------------------------------------------
# Forward pass
# ----------------------------------------------------------------------------
def attn_block(x, ap, groups):
    B, H, W, C = x.shape
    h = group_norm(x, *ap['gn'], groups=groups, swish=False)
    hf = h.reshape(B * H * W, C)
    # q/k/v emitted in bf16 directly (no extra HBM cast pass before attention);
    # the 1/sqrt(C) scale lives in the q weights.
    q = matmul_bias(hf, *ap['q']).reshape(B, H * W, C)
    k = matmul_bias(hf, *ap['k']).reshape(B, H * W, C)
    v = matmul_bias(hf, *ap['v']).reshape(B, H * W, C)
    o = attention(q, k, v)
    # residual `x + proj(o)` fused into the output 1x1 projection epilogue
    return conv1x1(o.reshape(B, H, W, C), *ap['o'], res=x)


def resblock(x, temb, p, cfg):
    g = cfg['res_gn_groups']
    h = group_norm(x, *p['gn1'], groups=g, swish=True)
    h = conv3x3(h, *p['conv1'])
    # temb_proj = Swish -> Linear; tiny (B x tdim), left to XLA.  Its broadcast
    # add is fused into the second GroupNorm (applied before the stats, exactly
    # matching `h += temb_proj(temb)[:, :, None, None]; h = block2(h)`).
    st = temb * jax.nn.sigmoid(temb)
    tp = jnp.dot(st, p['temb'][0]) + p['temb'][1]                   # (B, Cout)
    h = group_norm(h, *p['gn2'], groups=g, swish=True, tbias=tp)
    # TODO(synk): nn.Dropout(dropout_rate) omitted — forward assumed eval mode.
    if p['shortcut'] is not None:
        xr = conv1x1(x, *p['shortcut'])
    else:
        xr = x
    h = conv3x3(h, *p['conv2'], res=xr)                             # residual add fused
    if p['attn'] is not None:
        h = attn_block(h, p['attn'], g)
    return h


def unet_forward(params, x_nchw, t, cfg):
    x = jnp.transpose(x_nchw, (0, 2, 3, 1))                         # NCHW -> NHWC
    # Time embedding: Embedding -> Linear -> Swish -> Linear (tiny; plain JAX).
    temb = params['temb_table'][t]
    w1, b1 = params['temb_l1']
    w2, b2 = params['temb_l2']
    temb = jnp.dot(temb, w1) + b1
    temb = temb * jax.nn.sigmoid(temb)
    temb = jnp.dot(temb, w2) + b2

    h = conv3x3(x, *params['head'])
    hs = [h]
    for kind, bp in params['down']:
        if kind == 'res':
            h = resblock(h, temb, bp, cfg)
        else:                                                       # DownSample: 3x3 s2
            h = conv3x3_s2(h, *bp)
        hs.append(h)

    for bp in params['middle']:
        h = resblock(h, temb, bp, cfg)

    for kind, bp in params['up']:
        if kind == 'res':
            # TODO(synk): feed the skip as a second split-K operand of gn1/conv1
            # instead of materializing the concat in HBM (bf16 keeps it cheap).
            h = jnp.concatenate([h, hs.pop()], axis=-1)             # torch.cat(dim=1) in NHWC
            h = resblock(h, temb, bp, cfg)
        else:                                                       # UpSample: nearest 2x + conv
            # TODO(synk): fuse the nearest-2x upsample into the following conv's
            # slab build (src = out_idx // 2) instead of jnp.repeat in HBM.
            h = jnp.repeat(jnp.repeat(h, 2, axis=1), 2, axis=2)
            h = conv3x3(h, *bp)
    assert len(hs) == 0

    h = group_norm(h, *params['tail_gn'], groups=cfg['n_groupnorm'], swish=True)
    h = conv3x3(h, *params['tail_conv'], out_dtype=jnp.float32)
    return jnp.transpose(h, (0, 3, 1, 2))                           # NHWC -> NCHW


# ----------------------------------------------------------------------------
if __name__ == "__main__":
    cfg = dict(
        in_ch=3, base_ch=32, ch_mult=[1, 2], attn_list=[1], n_res_block=1,
        dropout_rate=0.5, T=100, tdim=128, n_groupnorm=32,
        res_gn_groups=32,   # ResBlock / AttnBlock GroupNorm groups (PyTorch hardcodes 32)
    )
    kg = KeyGen(jax.random.PRNGKey(0))
    params = build_unet_params(kg, cfg)

    kx, kt = jax.random.split(jax.random.PRNGKey(0))
    x = jax.random.normal(kx, (2, cfg['in_ch'], 16, 16), jnp.float32)   # NCHW like PyTorch
    t = jax.random.randint(kt, (2,), 0, cfg['T'])

    out = unet_forward(params, x, t, cfg)
    out = jax.block_until_ready(out)
    assert out.shape == (2, 3, 16, 16)
    assert out.dtype == jnp.float32
    print("KERNEL_OK")
</pallas_src>

<mosaic_0001>
module attributes {stable_mosaic.version = 11 : i64} {
  func.func @_conv3x3_kernel(%arg0: i32, %arg1: i32, %arg2: memref<1x18x18x3xf32, #tpu.memory_space<vmem>>, %arg3: memref<27x32xbf16, #tpu.memory_space<vmem>>, %arg4: memref<1x32xf32, #tpu.memory_space<vmem>>, %arg5: memref<1x16x16x32xbf16, #tpu.memory_space<vmem>>) attributes {dimension_semantics = [#tpu.dimension_semantics<parallel>, #tpu.dimension_semantics<parallel>], iteration_bounds = array<i64: 2, 1>, scalar_prefetch = 0 : i64, scratch_operands = 0 : i64, tpu.core_type = #tpu.core_type<tc>, window_params = [{transform_indices = @transform_0, window_bounds = array<i64: 1, 18, 18, 3>}, {transform_indices = @transform_1, window_bounds = array<i64: 27, 32>}, {transform_indices = @transform_2, window_bounds = array<i64: 1, 32>}, {transform_indices = @transform_3, window_bounds = array<i64: 1, 16, 16, 32>}]} {
    %c0 = arith.constant 0 : index
    %c0_0 = arith.constant 0 : index
    %0 = vector.load %arg3[%c0, %c0_0] : memref<27x32xbf16, #tpu.memory_space<vmem>>, vector<27x32xbf16>
    %c0_1 = arith.constant 0 : index
    %c0_2 = arith.constant 0 : index
    %c0_3 = arith.constant 0 : index
    %c0_4 = arith.constant 0 : index
    %1 = vector.load %arg2[%c0_1, %c0_2, %c0_3, %c0_4] : memref<1x18x18x3xf32, #tpu.memory_space<vmem>>, vector<1x16x16x3xf32>
    %2 = vector.shape_cast %1 : vector<1x16x16x3xf32> to vector<16x16x3xf32>
    %3 = vector.shape_cast %2 : vector<16x16x3xf32> to vector<256x3xf32>
    %4 = arith.truncf %3 : vector<256x3xf32> to vector<256x3xbf16>
    %5 = vector.extract_strided_slice %0 {offsets = [0, 0], sizes = [3, 32], strides = [1, 1]} : vector<27x32xbf16> to vector<3x32xbf16>
    %cst = arith.constant dense<0.000000e+00> : vector<256x32xf32>
    %6 = tpu.matmul %4, %5, %cst {dimension_numbers = #tpu.dot_dimension_numbers<[1], [0], [0], [1], [0, 0, 1, 1], [], []>} : vector<256x3xbf16>, vector<3x32xbf16>, vector<256x32xf32> -> vector<256x32xf32>
    %c0_5 = arith.constant 0 : index
    %c0_6 = arith.constant 0 : index
    %c1 = arith.constant 1 : index
    %c0_7 = arith.constant 0 : index
    %7 = vector.load %arg2[%c0_5, %c0_6, %c1, %c0_7] : memref<1x18x18x3xf32, #tpu.memory_space<vmem>>, vector<1x16x16x3xf32>
    %8 = vector.shape_cast %7 : vector<1x16x16x3xf32> to vector<16x16x3xf32>
    %9 = vector.shape_cast %8 : vector<16x16x3xf32> to vector<256x3xf32>
    %10 = arith.truncf %9 : vector<256x3xf32> to vector<256x3xbf16>
    %11 = vector.extract_strided_slice %0 {offsets = [3, 0], sizes = [3, 32], strides = [1, 1]} : vector<27x32xbf16> to vector<3x32xbf16>
    %cst_8 = arith.constant dense<0.000000e+00> : vector<256x32xf32>
    %12 = tpu.matmul %10, %11, %cst_8 {dimension_numbers = #tpu.dot_dimension_numbers<[1], [0], [0], [1], [0, 0, 1, 1], [], []>} : vector<256x3xbf16>, vector<3x32xbf16>, vector<256x32xf32> -> vector<256x32xf32>
    %13 = arith.addf %6, %12 : vector<256x32xf32>
    %c0_9 = arith.constant 0 : index
    %c0_10 = arith.constant 0 : index
    %c2 = arith.constant 2 : index
    %c0_11 = arith.constant 0 : index
    %14 = vector.load %arg2[%c0_9, %c0_10, %c2, %c0_11] : memref<1x18x18x3xf32, #tpu.memory_space<vmem>>, vector<1x16x16x3xf32>
    %15 = vector.shape_cast %14 : vector<1x16x16x3xf32> to vector<16x16x3xf32>
    %16 = vector.shape_cast %15 : vector<16x16x3xf32> to vector<256x3xf32>
    %17 = arith.truncf %16 : vector<256x3xf32> to vector<256x3xbf16>
    %18 = vector.extract_strided_slice %0 {offsets = [6, 0], sizes = [3, 32], strides = [1, 1]} : vector<27x32xbf16> to vector<3x32xbf16>
    %cst_12 = arith.constant dense<0.000000e+00> : vector<256x32xf32>
    %19 = tpu.matmul %17, %18, %cst_12 {dimension_numbers = #tpu.dot_dimension_numbers<[1], [0], [0], [1], [0, 0, 1, 1], [], []>} : vector<256x3xbf16>, vector<3x32xbf16>, vector<256x32xf32> -> vector<256x32xf32>
    %20 = arith.addf %13, %19 : vector<256x32xf32>
    %c0_13 = arith.constant 0 : index
    %c1_14 = arith.constant 1 : index
    %c0_15 = arith.constant 0 : index
    %c0_16 = arith.constant 0 : index
    %21 = vector.load %arg2[%c0_13, %c1_14, %c0_15, %c0_16] : memref<1x18x18x3xf32, #tpu.memory_space<vmem>>, vector<1x16x16x3xf32>
    %22 = vector.shape_cast %21 : vector<1x16x16x3xf32> to vector<16x16x3xf32>
    %23 = vector.shape_cast %22 : vector<16x16x3xf32> to vector<256x3xf32>
    %24 = arith.truncf %23 : vector<256x3xf32> to vector<256x3xbf16>
    %25 = vector.extract_strided_slice %0 {offsets = [9, 0], sizes = [3, 32], strides = [1, 1]} : vector<27x32xbf16> to vector<3x32xbf16>
    %cst_17 = arith.constant dense<0.000000e+00> : vector<256x32xf32>
    %26 = tpu.matmul %24, %25, %cst_17 {dimension_numbers = #tpu.dot_dimension_numbers<[1], [0], [0], [1], [0, 0, 1, 1], [], []>} : vector<256x3xbf16>, vector<3x32xbf16>, vector<256x32xf32> -> vector<256x32xf32>
    %27 = arith.addf %20, %26 : vector<256x32xf32>
    %c0_18 = arith.constant 0 : index
    %c1_19 = arith.constant 1 : index
    %c1_20 = arith.constant 1 : index
    %c0_21 = arith.constant 0 : index
    %28 = vector.load %arg2[%c0_18, %c1_19, %c1_20, %c0_21] : memref<1x18x18x3xf32, #tpu.memory_space<vmem>>, vector<1x16x16x3xf32>
    %29 = vector.shape_cast %28 : vector<1x16x16x3xf32> to vector<16x16x3xf32>
    %30 = vector.shape_cast %29 : vector<16x16x3xf32> to vector<256x3xf32>
    %31 = arith.truncf %30 : vector<256x3xf32> to vector<256x3xbf16>
    %32 = vector.extract_strided_slice %0 {offsets = [12, 0], sizes = [3, 32], strides = [1, 1]} : vector<27x32xbf16> to vector<3x32xbf16>
    %cst_22 = arith.constant dense<0.000000e+00> : vector<256x32xf32>
    %33 = tpu.matmul %31, %32, %cst_22 {dimension_numbers = #tpu.dot_dimension_numbers<[1], [0], [0], [1], [0, 0, 1, 1], [], []>} : vector<256x3xbf16>, vector<3x32xbf16>, vector<256x32xf32> -> vector<256x32xf32>
    %34 = arith.addf %27, %33 : vector<256x32xf32>
    %c0_23 = arith.constant 0 : index
    %c1_24 = arith.constant 1 : index
    %c2_25 = arith.constant 2 : index
    %c0_26 = arith.constant 0 : index
    %35 = vector.load %arg2[%c0_23, %c1_24, %c2_25, %c0_26] : memref<1x18x18x3xf32, #tpu.memory_space<vmem>>, vector<1x16x16x3xf32>
    %36 = vector.shape_cast %35 : vector<1x16x16x3xf32> to vector<16x16x3xf32>
    %37 = vector.shape_cast %36 : vector<16x16x3xf32> to vector<256x3xf32>
    %38 = arith.truncf %37 : vector<256x3xf32> to vector<256x3xbf16>
    %39 = vector.extract_strided_slice %0 {offsets = [15, 0], sizes = [3, 32], strides = [1, 1]} : vector<27x32xbf16> to vector<3x32xbf16>
    %cst_27 = arith.constant dense<0.000000e+00> : vector<256x32xf32>
    %40 = tpu.matmul %38, %39, %cst_27 {dimension_numbers = #tpu.dot_dimension_numbers<[1], [0], [0], [1], [0, 0, 1, 1], [], []>} : vector<256x3xbf16>, vector<3x32xbf16>, vector<256x32xf32> -> vector<256x32xf32>
    %41 = arith.addf %34, %40 : vector<256x32xf32>
    %c0_28 = arith.constant 0 : index
    %c2_29 = arith.constant 2 : index
    %c0_30 = arith.constant 0 : index
    %c0_31 = arith.constant 0 : index
    %42 = vector.load %arg2[%c0_28, %c2_29, %c0_30, %c0_31] : memref<1x18x18x3xf32, #tpu.memory_space<vmem>>, vector<1x16x16x3xf32>
    %43 = vector.shape_cast %42 : vector<1x16x16x3xf32> to vector<16x16x3xf32>
    %44 = vector.shape_cast %43 : vector<16x16x3xf32> to vector<256x3xf32>
    %45 = arith.truncf %44 : vector<256x3xf32> to vector<256x3xbf16>
    %46 = vector.extract_strided_slice %0 {offsets = [18, 0], sizes = [3, 32], strides = [1, 1]} : vector<27x32xbf16> to vector<3x32xbf16>
    %cst_32 = arith.constant dense<0.000000e+00> : vector<256x32xf32>
    %47 = tpu.matmul %45, %46, %cst_32 {dimension_numbers = #tpu.dot_dimension_numbers<[1], [0], [0], [1], [0, 0, 1, 1], [], []>} : vector<256x3xbf16>, vector<3x32xbf16>, vector<256x32xf32> -> vector<256x32xf32>
    %48 = arith.addf %41, %47 : vector<256x32xf32>
    %c0_33 = arith.constant 0 : index
    %c2_34 = arith.constant 2 : index
    %c1_35 = arith.constant 1 : index
    %c0_36 = arith.constant 0 : index
    %49 = vector.load %arg2[%c0_33, %c2_34, %c1_35, %c0_36] : memref<1x18x18x3xf32, #tpu.memory_space<vmem>>, vector<1x16x16x3xf32>
    %50 = vector.shape_cast %49 : vector<1x16x16x3xf32> to vector<16x16x3xf32>
    %51 = vector.shape_cast %50 : vector<16x16x3xf32> to vector<256x3xf32>
    %52 = arith.truncf %51 : vector<256x3xf32> to vector<256x3xbf16>
    %53 = vector.extract_strided_slice %0 {offsets = [21, 0], sizes = [3, 32], strides = [1, 1]} : vector<27x32xbf16> to vector<3x32xbf16>
    %cst_37 = arith.constant dense<0.000000e+00> : vector<256x32xf32>
    %54 = tpu.matmul %52, %53, %cst_37 {dimension_numbers = #tpu.dot_dimension_numbers<[1], [0], [0], [1], [0, 0, 1, 1], [], []>} : vector<256x3xbf16>, vector<3x32xbf16>, vector<256x32xf32> -> vector<256x32xf32>
    %55 = arith.addf %48, %54 : vector<256x32xf32>
    %c0_38 = arith.constant 0 : index
    %c2_39 = arith.constant 2 : index
    %c2_40 = arith.constant 2 : index
    %c0_41 = arith.constant 0 : index
    %56 = vector.load %arg2[%c0_38, %c2_39, %c2_40, %c0_41] : memref<1x18x18x3xf32, #tpu.memory_space<vmem>>, vector<1x16x16x3xf32>
    %57 = vector.shape_cast %56 : vector<1x16x16x3xf32> to vector<16x16x3xf32>
    %58 = vector.shape_cast %57 : vector<16x16x3xf32> to vector<256x3xf32>
    %59 = arith.truncf %58 : vector<256x3xf32> to vector<256x3xbf16>
    %60 = vector.extract_strided_slice %0 {offsets = [24, 0], sizes = [3, 32], strides = [1, 1]} : vector<27x32xbf16> to vector<3x32xbf16>
    %cst_42 = arith.constant dense<0.000000e+00> : vector<256x32xf32>
    %61 = tpu.matmul %59, %60, %cst_42 {dimension_numbers = #tpu.dot_dimension_numbers<[1], [0], [0], [1], [0, 0, 1, 1], [], []>} : vector<256x3xbf16>, vector<3x32xbf16>, vector<256x32xf32> -> vector<256x32xf32>
    %62 = arith.addf %55, %61 : vector<256x32xf32>
    %c0_43 = arith.constant 0 : index
    %c0_44 = arith.constant 0 : index
    %63 = vector.load %arg4[%c0_43, %c0_44] : memref<1x32xf32, #tpu.memory_space<vmem>>, vector<1x32xf32>
    %64 = vector.broadcast %63 : vector<1x32xf32> to vector<256x32xf32>
    %65 = arith.addf %62, %64 : vector<256x32xf32>
    %66 = vector.shape_cast %65 : vector<256x32xf32> to vector<16x16x32xf32>
    %67 = arith.truncf %66 : vector<16x16x32xf32> to vector<16x16x32xbf16>
    %c0_45 = arith.constant 0 : index
    %c0_46 = arith.constant 0 : index
    %c0_47 = arith.constant 0 : index
    %c0_48 = arith.constant 0 : index
    %68 = vector.load %arg5[%c0_45, %c0_46, %c0_47, %c0_48] : memref<1x16x16x32xbf16, #tpu.memory_space<vmem>>, vector<1x16x16x32xbf16>
    %69 = vector.shape_cast %68 : vector<1x16x16x32xbf16> to vector<16x16x32xbf16>
    %70 = vector.shape_cast %67 : vector<16x16x32xbf16> to vector<1x16x16x32xbf16>
    tpu.vector_store %arg5[%c0_45, %c0_46, %c0_47, %c0_48], %70 {strides = array<i32>} : memref<1x16x16x32xbf16, #tpu.memory_space<vmem>>, vector<1x16x16x32xbf16>,
    return
  }
  func.func @transform_0(%arg0: i32, %arg1: i32) -> (i32, i32, i32, i32) {
    %c0_i32 = arith.constant 0 : i32
    %c0_i32_0 = arith.constant 0 : i32
    %c0_i32_1 = arith.constant 0 : i32
    %c0_i32_2 = arith.constant 0 : i32
    return %arg0, %c0_i32, %c0_i32_0, %c0_i32_1 : i32, i32, i32, i32
  }
  func.func @transform_1(%arg0: i32, %arg1: i32) -> (i32, i32) {
    %c0_i32 = arith.constant 0 : i32
    %c0_i32_0 = arith.constant 0 : i32
    return %c0_i32, %arg1 : i32, i32
  }
  func.func @transform_2(%arg0: i32, %arg1: i32) -> (i32, i32) {
    %c0_i32 = arith.constant 0 : i32
    %c0_i32_0 = arith.constant 0 : i32
    return %c0_i32, %arg1 : i32, i32
  }
  func.func @transform_3(%arg0: i32, %arg1: i32) -> (i32, i32, i32, i32) {
    %c0_i32 = arith.constant 0 : i32
    %c0_i32_0 = arith.constant 0 : i32
    %c0_i32_1 = arith.constant 0 : i32
    return %arg0, %c0_i32, %c0_i32_0, %arg1 : i32, i32, i32, i32
  }
}

</mosaic_0001>

<llo_original>
// kernel: tpu_custom_call.1
$region0: #{tpu_custom_call.1}
  #allocation0 [shape = 'u32[]', space=smem, size = 0x4, offset = 0x4, fixed_abs, tag = 'smem constant byte address 0x4 - core index']
  #allocation1 [shape = 'u32[72,128]{1,0:T(1,128)}', space=vmem, size = 0x9000, scoped, tag = 'internal scratch']
  %s0 = inlined_call_operand.vmem [shape: f32[2,18,18,3], index: 0, kind: input, shape index: {}]
  %s1 = inlined_call_operand.vmem [shape: bf16[27,32], index: 1, kind: input, shape index: {}]
  %s2 = inlined_call_operand.vmem [shape: f32[1,32], index: 2, kind: input, shape index: {}]
  %s3 = inlined_call_operand.hbm [shape: bf16[2,16,16,32], index: 3, kind: output, shape index: {}]
  %s4 = sld [smem:[#allocation0]]
  $region45: #{tpu_custom_call.1} parent=0
    _
  %s6 = ssub.s32 1, %s4
  %s7 = scalar_select 0, %s6, %s4
  $region1: #{tpu_custom_call.1} parent=0
    #allocation2 [shape = 'u8[131072]{0}', space=vmem, size = 0x20000, scoped, tag = 'output window, operand 0']
    #allocation3 [shape = 's32[2]{0}', space=sflag, size = 0x8, scoped, tag = 'scoped memory for tpu_custom_call.1']
    %8 = vsyncpa [#allocation3], 0
    %s9 = scalar_lea.sflag [#allocation3], 1
    %10 = vsyncpa %s9, 0
    loop: start=0, step=1, limit=4
    $region2: #{tpu_custom_call.1} parent=1 // loop_pre_header
      _
    $region3: #{tpu_custom_call.1} parent=1 // loop_header
      %s12 = sphi 0, %s16
      %p13 = scmp.ge.s32.totalorder %s12, 4
      %s19 = sphi 0, %s31
      %s20 = sphi 0, %s27
      %s21 = sphi 0, %s19
      %s22 = sphi 0, %s20
      %s23 = sphi 0, %s21
      %s24 = sphi 0, %s22
      %s34 = sphi 0, %s36
      %s37 = sphi 0, %s34
      %s38 = sphi 0, %s37
      %s54 = sphi 0, %s38
      %s60 = sphi 0, %s62
      %s63 = sphi 0, %s60
      %s64 = sphi 0, %s63
      %s80 = sphi 0, %s64
      %s86 = sphi 0, %s88
      %s89 = sphi 0, %s86
      %s90 = sphi 0, %s89
      %s106 = sphi 0, %s90
      %s114 = sphi 0, %s116
      %s117 = sphi 0, %s114
      %s118 = sphi 0, %s117
      %s134 = sphi 0, %s118
    $region4: #{tpu_custom_call.1} parent=1 // loop_header_branch
      %15 = sbr.rel (%p13) target = $region8
    $region5: #{tpu_custom_call.1} parent=1 // loop_body
      %s17 = ssub.s32 %s12, 1
      %s18 = ssub.s32 %s12, 2
      %s25 = sadd.s32 1, %s20
      %p26 = scmp.ge.s32.totalorder %s25, 1
      %s27 = scalar_select %p26, 0, %s25
      %s28 = sadd.s32 1, %s19
      %s29 = scalar_select %p26, %s28, %s19
      %p30 = scmp.ge.s32.totalorder %s29, 2
      %s31 = scalar_select %p30, 0, %s29
      %s32 = ssub.s32 %s19, %s31
      %p33 = scmp.eq.s32.totalorder %s32, 0
      %s35 = sadd.s32 %s34, 1
      %s36 = scalar_select %p33, %s34, %s35
      %p39 = pneg %p33
      %p40 = scmp.eq.s32.totalorder %s12, 1
      %p41 = por %p39, %p40
      %p42 = scmp.ne.s32.totalorder %s34, %s37
      %p43 = scmp.eq.s32.totalorder %s12, 0
      %p44 = por %p42, %p43
      %p45 = scmp.ne.s32.totalorder %s34, %s37
      %p46 = scmp.eq.s32.totalorder %s17, 1
      %p47 = por %p45, %p46
      %p48 = scmp.ne.s32.totalorder %s37, %s38
      %p49 = scmp.eq.s32.totalorder %s17, 0
      %p50 = por %p48, %p49
      %p51 = scmp.ne.s32.totalorder %s37, %s38
      %p52 = scmp.eq.s32.totalorder %s18, 1
      %p53 = por %p51, %p52
      %p55 = scmp.ne.s32.totalorder %s38, %s54
      %p56 = scmp.eq.s32.totalorder %s18, 0
      %p57 = por %p55, %p56
      %s58 = ssub.s32 %s20, %s27
      %p59 = scmp.eq.s32.totalorder %s58, 0
      %s61 = sadd.s32 %s60, 1
      %s62 = scalar_select %p59, %s60, %s61
      %p65 = pneg %p59
      %p66 = scmp.eq.s32.totalorder %s12, 1
      %p67 = por %p65, %p66
      %p68 = scmp.ne.s32.totalorder %s60, %s63
      %p69 = scmp.eq.s32.totalorder %s12, 0
      %p70 = por %p68, %p69
      %p71 = scmp.ne.s32.totalorder %s60, %s63
      %p72 = scmp.eq.s32.totalorder %s17, 1
      %p73 = por %p71, %p72
      %p74 = scmp.ne.s32.totalorder %s63, %s64
      %p75 = scmp.eq.s32.totalorder %s17, 0
      %p76 = por %p74, %p75
      %p77 = scmp.ne.s32.totalorder %s63, %s64
      %p78 = scmp.eq.s32.totalorder %s18, 1
      %p79 = por %p77, %p78
      %p81 = scmp.ne.s32.totalorder %s64, %s80
      %p82 = scmp.eq.s32.totalorder %s18, 0
      %p83 = por %p81, %p82
      %s84 = ssub.s32 %s20, %s27
      %p85 = scmp.eq.s32.totalorder %s84, 0
      %s87 = sadd.s32 %s86, 1
      %s88 = scalar_select %p85, %s86, %s87
      %p91 = pneg %p85
      %p92 = scmp.eq.s32.totalorder %s12, 1
      %p93 = por %p91, %p92
      %p94 = scmp.ne.s32.totalorder %s86, %s89
      %p95 = scmp.eq.s32.totalorder %s12, 0
      %p96 = por %p94, %p95
      %p97 = scmp.ne.s32.totalorder %s86, %s89
      %p98 = scmp.eq.s32.totalorder %s17, 1
      %p99 = por %p97, %p98
      %p100 = scmp.ne.s32.totalorder %s89, %s90
      %p101 = scmp.eq.s32.totalorder %s17, 0
      %p102 = por %p100, %p101
      %p103 = scmp.ne.s32.totalorder %s89, %s90
      %p104 = scmp.eq.s32.totalorder %s18, 1
      %p105 = por %p103, %p104
      %p107 = scmp.ne.s32.totalorder %s90, %s106
      %p108 = scmp.eq.s32.totalorder %s18, 0
      %p109 = por %p107, %p108
      %s110 = ssub.s32 %s19, %s31
      %s111 = ssub.s32 %s20, %s27
      %s112 = sor.u32 %s110, %s111
      %p113 = scmp.eq.s32.totalorder %s112, 0
      %s115 = sadd.s32 %s114, 1
      %s116 = scalar_select %p113, %s114, %s115
      %p119 = pneg %p113
      %p120 = scmp.eq.s32.totalorder %s12, 1
      %p121 = por %p119, %p120
      %p122 = scmp.ne.s32.totalorder %s114, %s117
      %p123 = scmp.eq.s32.totalorder %s12, 0
      %p124 = por %p122, %p123
      %p125 = scmp.ne.s32.totalorder %s114, %s117
      %p126 = scmp.eq.s32.totalorder %s17, 1
      %p127 = por %p125, %p126
      %p128 = scmp.ne.s32.totalorder %s117, %s118
      %p129 = scmp.eq.s32.totalorder %s17, 0
      %p130 = por %p128, %p129
      %p131 = scmp.ne.s32.totalorder %s117, %s118
      %p132 = scmp.eq.s32.totalorder %s18, 1
      %p133 = por %p131, %p132
      %p135 = scmp.ne.s32.totalorder %s118, %s134
      %p136 = scmp.eq.s32.totalorder %s18, 0
      %p137 = por %p135, %p136
      %p138 = scmp.le.s32.totalorder 1, %s12
      %p139 = scmp.lt.s32.totalorder %s12, 3
      %p140 = pnand %p138, %p139
      %p141 = pneg %p140
      // Predicated region
      $region9: #{tpu_custom_call.1} parent=5 // pred_check
        _
      $region10: #{tpu_custom_call.1} parent=5 // pred_check_branch
        %143 = sbr.rel (%p140) target = $region12
      $region11: #{tpu_custom_call.1} parent=5 // pred_region
        %s144 = ssub.s32 %s12, 1
        // Predicated region
        $region13: #{tpu_custom_call.1} parent=11 // pred_check
          %p145 = pneg %p76
        $region14: #{tpu_custom_call.1} parent=11 // pred_check_branch
          %147 = sbr.rel (%p145) target = $region16
        $region15: #{tpu_custom_call.1} parent=11 // pred_region
          %p148 = scmp.lt.s32.totalorder %s22, 0
          %s149 = scalar_select %p148, %s22, 0
          %s150 = smul.addr %s149, 4
          %s151 = scalar_lea.vmem %s1, %s150
        $region16: #{tpu_custom_call.1} parent=11 // pred_fallthru
          _
        // Predicated region
        $region17: #{tpu_custom_call.1} parent=11 // pred_check
          %p152 = pneg %p102
        $region18: #{tpu_custom_call.1} parent=11 // pred_check_branch
          %154 = sbr.rel (%p152) target = $region20
        $region19: #{tpu_custom_call.1} parent=11 // pred_region
          %p155 = scmp.lt.s32.totalorder %s22, 0
          %s156 = scalar_select %p155, %s22, 0
          %s157 = scalar_lea.vmem %s2, %s156
        $region20: #{tpu_custom_call.1} parent=11 // pred_fallthru
          _
      $region12: #{tpu_custom_call.1} parent=5 // pred_fallthru
        _
      %p158 = scmp.lt.s32.totalorder %s12, 2
      // Predicated region
      $region21: #{tpu_custom_call.1} parent=5 // pred_check
        %p159 = pneg %p158
      $region22: #{tpu_custom_call.1} parent=5 // pred_check_branch
        %161 = sbr.rel (%p159) target = $region24
      $region23: #{tpu_custom_call.1} parent=5 // pred_region
        // Predicated region
        $region25: #{tpu_custom_call.1} parent=23 // pred_check
          %p162 = pneg %p44
        $region26: #{tpu_custom_call.1} parent=23 // pred_check_branch
          %164 = sbr.rel (%p162) target = $region28
        $region27: #{tpu_custom_call.1} parent=23 // pred_region
          %p165 = scmp.lt.s32.totalorder %s19, 1
          %s166 = scalar_select %p165, %s19, 1
          %s167 = smul.addr %s166, 54
          %s168 = smul.addr %s167, 8
          %s169 = scalar_lea.vmem %s0, %s168
        $region28: #{tpu_custom_call.1} parent=23 // pred_fallthru
          _
      $region24: #{tpu_custom_call.1} parent=5 // pred_fallthru
        _
      %p170 = scmp.le.s32.totalorder 1, %s12
      %p171 = scmp.lt.s32.totalorder %s12, 3
      %p172 = pnand %p170, %p171
      %p173 = pneg %p172
      // Predicated region
      $region29: #{tpu_custom_call.1} parent=5 // pred_check
        _
      $region30: #{tpu_custom_call.1} parent=5 // pred_check_branch
        %175 = sbr.rel (%p172) target = $region32
      $region31: #{tpu_custom_call.1} parent=5 // pred_region
        %s176 = ssub.s32 %s12, 1
        %p177 = scmp.lt.s32.totalorder %s21, 1
        %s178 = scalar_select %p177, %s21, 1
        %s179 = smul.addr %s178, 54
        %s180 = smul.addr %s179, 8
        %s181 = scalar_lea.vmem %s0, %s180
        %p182 = pneg %p50
        %p183 = pneg %p47
        %p184 = scmp.lt.s32.totalorder %s22, 0
        %s185 = scalar_select %p184, %s22, 0
        %s186 = smul.addr %s185, 4
        %s187 = scalar_lea.vmem %s1, %s186
        %p188 = pneg %p76
        %p189 = pneg %p73
        %p190 = scmp.lt.s32.totalorder %s22, 0
        %s191 = scalar_select %p190, %s22, 0
        %s192 = scalar_lea.vmem %s2, %s191
        %p193 = pneg %p102
        %p194 = pneg %p99
        %p195 = pneg %p130
        %p196 = pneg %p127
        %s197 = sand.u32 %s117, 1
        %s198 = scalar_lea.sflag [#allocation3], %s197
        %s199 = sand.u32 %s117, 1
        %s200 = smul.addr %s199, 128
        %s201 = scalar_lea.vmem [#allocation2], %s200
        %p202 = scmp.lt.s32.totalorder %s21, 1
        %s203 = scalar_select %p202, %s21, 1
        %s204 = smul.addr %s203, 54
        %s205 = smul.addr %s204, 8
        %s206 = scalar_lea.vmem %s0, %s205
        %p207 = scmp.lt.s32.totalorder %s22, 0
        %s208 = scalar_select %p207, %s22, 0
        %s209 = smul.addr %s208, 4
        %s210 = scalar_lea.vmem %s1, %s209
        %p211 = scmp.lt.s32.totalorder %s22, 0
        %s212 = scalar_select %p211, %s22, 0
        %s213 = scalar_lea.vmem %s2, %s212
        %v215 = vld [vmem:[%s210] sm:$0xf]
        %v216 = vld [vmem:[%s210 + $0x4] sm:$0xf]
        %v217 = vld [vmem:[%s210 + $0x8] sm:$0xf]
        %v218 = vld [vmem:[%s210 + $0xc] sm:$0x3]
        %v219 = vld [vmem:[%s206] sm:$0xff]
        %v220 = vld [vmem:[%s206 + $0x8] sm:$0xff]
        %v221 = vld [vmem:[%s206 + $0x18] sm:$0xff]
        %v222 = vld [vmem:[%s206 + $0x20] sm:$0xff]
        %v223 = vld [vmem:[%s206 + $0x30] sm:$0xff]
        %v224 = vld [vmem:[%s206 + $0x38] sm:$0xff]
        %v225 = vld [vmem:[%s206 + $0x48] sm:$0xff]
        %v226 = vld [vmem:[%s206 + $0x50] sm:$0xff]
        %v227 = vld [vmem:[%s206 + $0x60] sm:$0xff]
        %v228 = vld [vmem:[%s206 + $0x68] sm:$0xff]
        %v229 = vld [vmem:[%s206 + $0x78] sm:$0xff]
        %v230 = vld [vmem:[%s206 + $0x80] sm:$0xff]
        %v231 = vld [vmem:[%s206 + $0x90] sm:$0xff]
        %v232 = vld [vmem:[%s206 + $0x98] sm:$0xff]
        %v233 = vld [vmem:[%s206 + $0xa8] sm:$0xff]
        %v234 = vld [vmem:[%s206 + $0xb0] sm:$0xff]
        %v235 = vld [vmem:[%s206 + $0xc0] sm:$0xff]
        %v236 = vld [vmem:[%s206 + $0xc8] sm:$0xff]
        %v237 = vld [vmem:[%s206 + $0xd8] sm:$0xff]
        %v238 = vld [vmem:[%s206 + $0xe0] sm:$0xff]
        %v239 = vld [vmem:[%s206 + $0xf0] sm:$0xff]
        %v240 = vld [vmem:[%s206 + $0xf8] sm:$0xff]
        %v241 = vld [vmem:[%s206 + $0x108] sm:$0xff]
        %v242 = vld [vmem:[%s206 + $0x110] sm:$0xff]
        %v243 = vld [vmem:[%s206 + $0x120] sm:$0xff]
        %v244 = vld [vmem:[%s206 + $0x128] sm:$0xff]
        %v245 = vld [vmem:[%s206 + $0x138] sm:$0xff]
        %v246 = vld [vmem:[%s206 + $0x140] sm:$0xff]
        %v247 = vld [vmem:[%s206 + $0x150] sm:$0xff]
        %v248 = vld [vmem:[%s206 + $0x158] sm:$0xff]
        %v249 = vld [vmem:[%s206 + $0x168] sm:$0xff]
        %v250 = vld [vmem:[%s206 + $0x170] sm:$0xff]
        %v251 = vpack.c.bf16 %v220, %v219
        %v252 = vpack.c.bf16 %v222, %v221
        %v253 = vpack.c.bf16 %v224, %v223
        %v254 = vpack.c.bf16 %v226, %v225
        %v255 = vpack.c.bf16 %v228, %v227
        %v256 = vpack.c.bf16 %v230, %v229
        %v257 = vpack.c.bf16 %v232, %v231
        %v258 = vpack.c.bf16 %v234, %v233
        %v259 = vpack.c.bf16 %v236, %v235
        %v260 = vpack.c.bf16 %v238, %v237
        %v261 = vpack.c.bf16 %v240, %v239
        %v262 = vpack.c.bf16 %v242, %v241
        %v263 = vpack.c.bf16 %v244, %v243
        %v264 = vpack.c.bf16 %v246, %v245
        %v265 = vpack.c.bf16 %v248, %v247
        %v266 = vpack.c.bf16 %v250, %v249
        %v267 = vld [vmem:[%s206 + $0x1] sm:$0xff]
        %v268 = vld [vmem:[%s206 + $0x9] sm:$0xff]
        %v269 = vld [vmem:[%s206 + $0x19] sm:$0xff]
        %v270 = vld [vmem:[%s206 + $0x21] sm:$0xff]
        %v271 = vld [vmem:[%s206 + $0x31] sm:$0xff]
        %v272 = vld [vmem:[%s206 + $0x39] sm:$0xff]
        %v273 = vld [vmem:[%s206 + $0x49] sm:$0xff]
        %v274 = vld [vmem:[%s206 + $0x51] sm:$0xff]
        %v275 = vld [vmem:[%s206 + $0x61] sm:$0xff]
        %v276 = vld [vmem:[%s206 + $0x69] sm:$0xff]
        %v277 = vld [vmem:[%s206 + $0x79] sm:$0xff]
        %v278 = vld [vmem:[%s206 + $0x81] sm:$0xff]
        %v279 = vld [vmem:[%s206 + $0x91] sm:$0xff]
        %v280 = vld [vmem:[%s206 + $0x99] sm:$0xff]
        %v281 = vld [vmem:[%s206 + $0xa9] sm:$0xff]
        %v282 = vld [vmem:[%s206 + $0xb1] sm:$0xff]
        %v283 = vld [vmem:[%s206 + $0xc1] sm:$0xff]
        %v284 = vld [vmem:[%s206 + $0xc9] sm:$0xff]
        %v285 = vld [vmem:[%s206 + $0xd9] sm:$0xff]
        %v286 = vld [vmem:[%s206 + $0xe1] sm:$0xff]
        %v287 = vld [vmem:[%s206 + $0xf1] sm:$0xff]
        %v288 = vld [vmem:[%s206 + $0xf9] sm:$0xff]
        %v289 = vld [vmem:[%s206 + $0x109] sm:$0xff]
        %v290 = vld [vmem:[%s206 + $0x111] sm:$0xff]
        %v291 = vld [vmem:[%s206 + $0x121] sm:$0xff]
        %v292 = vld [vmem:[%s206 + $0x129] sm:$0xff]
        %v293 = vld [vmem:[%s206 + $0x139] sm:$0xff]
        %v294 = vld [vmem:[%s206 + $0x141] sm:$0xff]
        %v295 = vld [vmem:[%s206 + $0x151] sm:$0xff]
        %v296 = vld [vmem:[%s206 + $0x159] sm:$0xff]
        %v297 = vld [vmem:[%s206 + $0x169] sm:$0xff]
        %v298 = vld [vmem:[%s206 + $0x171] sm:$0xff]
        %v299 = vpack.c.bf16 %v268, %v267
        %v300 = vpack.c.bf16 %v270, %v269
        %v301 = vpack.c.bf16 %v272, %v271
        %v302 = vpack.c.bf16 %v274, %v273
        %v303 = vpack.c.bf16 %v276, %v275
        %v304 = vpack.c.bf16 %v278, %v277
        %v305 = vpack.c.bf16 %v280, %v279
        %v306 = vpack.c.bf16 %v282, %v281
        %v307 = vpack.c.bf16 %v284, %v283
        %v308 = vpack.c.bf16 %v286, %v285
        %v309 = vpack.c.bf16 %v288, %v287
        %v310 = vpack.c.bf16 %v290, %v289
        %v311 = vpack.c.bf16 %v292, %v291
        %v312 = vpack.c.bf16 %v294, %v293
        %v313 = vpack.c.bf16 %v296, %v295
        %v314 = vpack.c.bf16 %v298, %v297
        %v316 = vunpack.c.l.b16 %v215
        %v317 = vpack.c.b16 %v316, %v316
        %v319 = vshrl.u32 %v317, 16
        %v321 = vrot.slane %v319, 1
        %v322 = vshll.u32 %v317, 16
        %v324 = vrot.slane %v322, 2
        %v325 = vor.u32 %v321, %v324
        %vm326 = vcmask 23552
        %v328 = vsel %vm326, %v299, 0
        %v331 = vsel %vm326, %v300, 0
        %v334 = vsel %vm326, %v301, 0
        %v337 = vsel %vm326, %v302, 0
        %v340 = vsel %vm326, %v303, 0
        %v343 = vsel %vm326, %v304, 0
        %v346 = vsel %vm326, %v305, 0
        %v349 = vsel %vm326, %v306, 0
        %v352 = vsel %vm326, %v307, 0
        %v355 = vsel %vm326, %v308, 0
        %v358 = vsel %vm326, %v309, 0
        %v361 = vsel %vm326, %v310, 0
        %v364 = vsel %vm326, %v311, 0
        %v367 = vsel %vm326, %v312, 0
        %v370 = vsel %vm326, %v313, 0
        %v373 = vsel %vm326, %v314, 0
        %vm375 = vcmask 1040384
        %vm376 = vcmask 1041408
        %v377 = vsel %vm375, 4294967295, 65535
        %v378 = vsel %vm376, %v377, 0
        %v380 = vand.u32 %v325, %v378
        %382 = vmatpush.bf16.msra.mxu0 0
        %383 = vmatpush.bf16.msra.mxu0 0
        %384 = vmatpush.bf16.msra.mxu0 0
        %385 = vmatpush.bf16.msra.mxu0 0
        %386 = vmatpush.bf16.msra.mxu0 0
        %387 = vmatpush.bf16.msra.mxu0 0
        %388 = vmatpush.bf16.msra.mxu0 0
        %389 = vmatpush.bf16.msra.mxu0 %v380
        %390 = vmatmul.bf16.gmra.mxu0 %v328
        %v391 = vpop.f32.mrf.mxu0
        %v392 = vadd.f32 0.0, %v391
        %v393 = vpop.f32.mrf.mxu0
        %v394 = vadd.f32 0.0, %v393
        %395 = vmatmul.bf16.gmra.mxu0 %v331
        %v396 = vpop.f32.mrf.mxu0
        %v397 = vadd.f32 0.0, %v396
        %v398 = vpop.f32.mrf.mxu0
        %v399 = vadd.f32 0.0, %v398
        %400 = vmatmul.bf16.gmra.mxu0 %v334
        %v401 = vpop.f32.mrf.mxu0
        %v402 = vadd.f32 0.0, %v401
        %v403 = vpop.f32.mrf.mxu0
        %v404 = vadd.f32 0.0, %v403
        %405 = vmatmul.bf16.gmra.mxu0 %v337
        %v406 = vpop.f32.mrf.mxu0
        %v407 = vadd.f32 0.0, %v406
        %v408 = vpop.f32.mrf.mxu0
        %v409 = vadd.f32 0.0, %v408
        %410 = vmatmul.bf16.gmra.mxu0 %v340
        %v411 = vpop.f32.mrf.mxu0
        %v412 = vadd.f32 0.0, %v411
        %v413 = vpop.f32.mrf.mxu0
        %v414 = vadd.f32 0.0, %v413
        %415 = vmatmul.bf16.gmra.mxu0 %v343
        %v416 = vpop.f32.mrf.mxu0
        %v417 = vadd.f32 0.0, %v416
        %v418 = vpop.f32.mrf.mxu0
        %v419 = vadd.f32 0.0, %v418
        %420 = vmatmul.bf16.gmra.mxu0 %v346
        %v421 = vpop.f32.mrf.mxu0
        %v422 = vadd.f32 0.0, %v421
        %v423 = vpop.f32.mrf.mxu0
        %v424 = vadd.f32 0.0, %v423
        %425 = vmatmul.bf16.gmra.mxu0 %v349
        %v426 = vpop.f32.mrf.mxu0
        %v427 = vadd.f32 0.0, %v426
        %v428 = vpop.f32.mrf.mxu0
        %v429 = vadd.f32 0.0, %v428
        %430 = vmatmul.bf16.gmra.mxu0 %v352
        %v431 = vpop.f32.mrf.mxu0
        %v432 = vadd.f32 0.0, %v431
        %v433 = vpop.f32.mrf.mxu0
        %v434 = vadd.f32 0.0, %v433
        %435 = vmatmul.bf16.gmra.mxu0 %v355
        %v436 = vpop.f32.mrf.mxu0
        %v437 = vadd.f32 0.0, %v436
        %v438 = vpop.f32.mrf.mxu0
        %v439 = vadd.f32 0.0, %v438
        %440 = vmatmul.bf16.gmra.mxu0 %v358
        %v441 = vpop.f32.mrf.mxu0
        %v442 = vadd.f32 0.0, %v441
        %v443 = vpop.f32.mrf.mxu0
        %v444 = vadd.f32 0.0, %v443
        %445 = vmatmul.bf16.gmra.mxu0 %v361
        %v446 = vpop.f32.mrf.mxu0
        %v447 = vadd.f32 0.0, %v446
        %v448 = vpop.f32.mrf.mxu0
        %v449 = vadd.f32 0.0, %v448
        %450 = vmatmul.bf16.gmra.mxu0 %v364
        %v451 = vpop.f32.mrf.mxu0
        %v452 = vadd.f32 0.0, %v451
        %v453 = vpop.f32.mrf.mxu0
        %v454 = vadd.f32 0.0, %v453
        %455 = vmatmul.bf16.gmra.mxu0 %v367
        %v456 = vpop.f32.mrf.mxu0
        %v457 = vadd.f32 0.0, %v456
        %v458 = vpop.f32.mrf.mxu0
        %v459 = vadd.f32 0.0, %v458
        %460 = vmatmul.bf16.gmra.mxu0 %v370
        %v461 = vpop.f32.mrf.mxu0
        %v462 = vadd.f32 0.0, %v461
        %v463 = vpop.f32.mrf.mxu0
        %v464 = vadd.f32 0.0, %v463
        %465 = vmatmul.bf16.gmra.mxu0 %v373
        %v466 = vpop.f32.mrf.mxu0
        %v467 = vadd.f32 0.0, %v466
        %v468 = vpop.f32.mrf.mxu0
        %v469 = vadd.f32 0.0, %v468
        %470 = vdwg.mxu0
        %v472 = vsel %vm326, %v251, 0
        %v475 = vsel %vm326, %v252, 0
        %v478 = vsel %vm326, %v253, 0
        %v481 = vsel %vm326, %v254, 0
        %v484 = vsel %vm326, %v255, 0
        %v487 = vsel %vm326, %v256, 0
        %v490 = vsel %vm326, %v257, 0
        %v493 = vsel %vm326, %v258, 0
        %v496 = vsel %vm326, %v259, 0
        %v499 = vsel %vm326, %v260, 0
        %v502 = vsel %vm326, %v261, 0
        %v505 = vsel %vm326, %v262, 0
        %v508 = vsel %vm326, %v263, 0
        %v511 = vsel %vm326, %v264, 0
        %v514 = vsel %vm326, %v265, 0
        %v517 = vsel %vm326, %v266, 0
        %v520 = vand.u32 %v215, %v378
        %522 = vmatpush.bf16.msra.mxu0 0
        %523 = vmatpush.bf16.msra.mxu0 0
        %524 = vmatpush.bf16.msra.mxu0 0
        %525 = vmatpush.bf16.msra.mxu0 0
        %526 = vmatpush.bf16.msra.mxu0 0
        %527 = vmatpush.bf16.msra.mxu0 0
        %528 = vmatpush.bf16.msra.mxu0 0
        %529 = vmatpush.bf16.msra.mxu0 %v520
        %530 = vmatmul.bf16.gmra.mxu0 %v472
        %v531 = vpop.f32.mrf.mxu0
        %v532 = vadd.f32 %v392, %v531
        %v533 = vpop.f32.mrf.mxu0
        %v534 = vadd.f32 %v394, %v533
        %535 = vmatmul.bf16.gmra.mxu0 %v475
        %v536 = vpop.f32.mrf.mxu0
        %v537 = vadd.f32 %v397, %v536
        %v538 = vpop.f32.mrf.mxu0
        %v539 = vadd.f32 %v399, %v538
        %540 = vmatmul.bf16.gmra.mxu0 %v478
        %v541 = vpop.f32.mrf.mxu0
        %v542 = vadd.f32 %v402, %v541
        %v543 = vpop.f32.mrf.mxu0
        %v544 = vadd.f32 %v404, %v543
        %545 = vmatmul.bf16.gmra.mxu0 %v481
        %v546 = vpop.f32.mrf.mxu0
        %v547 = vadd.f32 %v407, %v546
        %v548 = vpop.f32.mrf.mxu0
        %v549 = vadd.f32 %v409, %v548
        %550 = vmatmul.bf16.gmra.mxu0 %v484
        %v551 = vpop.f32.mrf.mxu0
        %v552 = vadd.f32 %v412, %v551
        %v553 = vpop.f32.mrf.mxu0
        %v554 = vadd.f32 %v414, %v553
        %555 = vmatmul.bf16.gmra.mxu0 %v487
        %v556 = vpop.f32.mrf.mxu0
        %v557 = vadd.f32 %v417, %v556
        %v558 = vpop.f32.mrf.mxu0
        %v559 = vadd.f32 %v419, %v558
        %560 = vmatmul.bf16.gmra.mxu0 %v490
        %v561 = vpop.f32.mrf.mxu0
        %v562 = vadd.f32 %v422, %v561
        %v563 = vpop.f32.mrf.mxu0
        %v564 = vadd.f32 %v424, %v563
        %565 = vmatmul.bf16.gmra.mxu0 %v493
        %v566 = vpop.f32.mrf.mxu0
        %v567 = vadd.f32 %v427, %v566
        %v568 = vpop.f32.mrf.mxu0
        %v569 = vadd.f32 %v429, %v568
        %570 = vmatmul.bf16.gmra.mxu0 %v496
        %v571 = vpop.f32.mrf.mxu0
        %v572 = vadd.f32 %v432, %v571
        %v573 = vpop.f32.mrf.mxu0
        %v574 = vadd.f32 %v434, %v573
        %575 = vmatmul.bf16.gmra.mxu0 %v499
        %v576 = vpop.f32.mrf.mxu0
        %v577 = vadd.f32 %v437, %v576
        %v578 = vpop.f32.mrf.mxu0
        %v579 = vadd.f32 %v439, %v578
        %580 = vmatmul.bf16.gmra.mxu0 %v502
        %v581 = vpop.f32.mrf.mxu0
        %v582 = vadd.f32 %v442, %v581
        %v583 = vpop.f32.mrf.mxu0
        %v584 = vadd.f32 %v444, %v583
        %585 = vmatmul.bf16.gmra.mxu0 %v505
        %v586 = vpop.f32.mrf.mxu0
        %v587 = vadd.f32 %v447, %v586
        %v588 = vpop.f32.mrf.mxu0
        %v589 = vadd.f32 %v449, %v588
        %590 = vmatmul.bf16.gmra.mxu0 %v508
        %v591 = vpop.f32.mrf.mxu0
        %v592 = vadd.f32 %v452, %v591
        %v593 = vpop.f32.mrf.mxu0
        %v594 = vadd.f32 %v454, %v593
        %595 = vmatmul.bf16.gmra.mxu0 %v511
        %v596 = vpop.f32.mrf.mxu0
        %v597 = vadd.f32 %v457, %v596
        %v598 = vpop.f32.mrf.mxu0
        %v599 = vadd.f32 %v459, %v598
        %600 = vmatmul.bf16.gmra.mxu0 %v514
        %v601 = vpop.f32.mrf.mxu0
        %v602 = vadd.f32 %v462, %v601
        %v603 = vpop.f32.mrf.mxu0
        %v604 = vadd.f32 %v464, %v603
        %605 = vmatmul.bf16.gmra.mxu0 %v517
        %v606 = vpop.f32.mrf.mxu0
        %v607 = vadd.f32 %v467, %v606
        %v608 = vpop.f32.mrf.mxu0
        %v609 = vadd.f32 %v469, %v608
        %610 = vdwg.mxu0
        %v611 = vld [vmem:[%s206 + $0x2] sm:$0xff]
        %v612 = vld [vmem:[%s206 + $0xa] sm:$0xff]
        %v613 = vld [vmem:[%s206 + $0x1a] sm:$0xff]
        %v614 = vld [vmem:[%s206 + $0x22] sm:$0xff]
        %v615 = vld [vmem:[%s206 + $0x32] sm:$0xff]
        %v616 = vld [vmem:[%s206 + $0x3a] sm:$0xff]
        %v617 = vld [vmem:[%s206 + $0x4a] sm:$0xff]
        %v618 = vld [vmem:[%s206 + $0x52] sm:$0xff]
        %v619 = vld [vmem:[%s206 + $0x62] sm:$0xff]
        %v620 = vld [vmem:[%s206 + $0x6a] sm:$0xff]
        %v621 = vld [vmem:[%s206 + $0x7a] sm:$0xff]
        %v622 = vld [vmem:[%s206 + $0x82] sm:$0xff]
        %v623 = vld [vmem:[%s206 + $0x92] sm:$0xff]
        %v624 = vld [vmem:[%s206 + $0x9a] sm:$0xff]
        %v625 = vld [vmem:[%s206 + $0xaa] sm:$0xff]
        %v626 = vld [vmem:[%s206 + $0xb2] sm:$0xff]
        %v627 = vld [vmem:[%s206 + $0xc2] sm:$0xff]
        %v628 = vld [vmem:[%s206 + $0xca] sm:$0xff]
        %v629 = vld [vmem:[%s206 + $0xda] sm:$0xff]
        %v630 = vld [vmem:[%s206 + $0xe2] sm:$0xff]
        %v631 = vld [vmem:[%s206 + $0xf2] sm:$0xff]
        %v632 = vld [vmem:[%s206 + $0xfa] sm:$0xff]
        %v633 = vld [vmem:[%s206 + $0x10a] sm:$0xff]
        %v634 = vld [vmem:[%s206 + $0x112] sm:$0xff]
        %v635 = vld [vmem:[%s206 + $0x122] sm:$0xff]
        %v636 = vld [vmem:[%s206 + $0x12a] sm:$0xff]
        %v637 = vld [vmem:[%s206 + $0x13a] sm:$0xff]
        %v638 = vld [vmem:[%s206 + $0x142] sm:$0xff]
        %v639 = vld [vmem:[%s206 + $0x152] sm:$0xff]
        %v640 = vld [vmem:[%s206 + $0x15a] sm:$0xff]
        %v641 = vld [vmem:[%s206 + $0x16a] sm:$0xff]
        %v642 = vld [vmem:[%s206 + $0x172] sm:$0xff]
        %v643 = vpack.c.bf16 %v612, %v611
        %v644 = vpack.c.bf16 %v614, %v613
        %v645 = vpack.c.bf16 %v616, %v615
        %v646 = vpack.c.bf16 %v618, %v617
        %v647 = vpack.c.bf16 %v620, %v619
        %v648 = vpack.c.bf16 %v622, %v621
        %v649 = vpack.c.bf16 %v624, %v623
        %v650 = vpack.c.bf16 %v626, %v625
        %v651 = vpack.c.bf16 %v628, %v627
        %v652 = vpack.c.bf16 %v630, %v629
        %v653 = vpack.c.bf16 %v632, %v631
        %v654 = vpack.c.bf16 %v634, %v633
        %v655 = vpack.c.bf16 %v636, %v635
        %v656 = vpack.c.bf16 %v638, %v637
        %v657 = vpack.c.bf16 %v640, %v639
        %v658 = vpack.c.bf16 %v642, %v641
        %v660 = vunpack.c.l.b16 %v216
        %v661 = vpack.c.b16 %v660, %v316
        %v662 = vrot.slane %v661, 3
        %v664 = vsel %vm326, %v643, 0
        %v667 = vsel %vm326, %v644, 0
        %v670 = vsel %vm326, %v645, 0
        %v673 = vsel %vm326, %v646, 0
        %v676 = vsel %vm326, %v647, 0
        %v679 = vsel %vm326, %v648, 0
        %v682 = vsel %vm326, %v649, 0
        %v685 = vsel %vm326, %v650, 0
        %v688 = vsel %vm326, %v651, 0
        %v691 = vsel %vm326, %v652, 0
        %v694 = vsel %vm326, %v653, 0
        %v697 = vsel %vm326, %v654, 0
        %v700 = vsel %vm326, %v655, 0
        %v703 = vsel %vm326, %v656, 0
        %v706 = vsel %vm326, %v657, 0
        %v709 = vsel %vm326, %v658, 0
        %v712 = vand.u32 %v662, %v378
        %714 = vmatpush.bf16.msra.mxu0 0
        %715 = vmatpush.bf16.msra.mxu0 0
        %716 = vmatpush.bf16.msra.mxu0 0
        %717 = vmatpush.bf16.msra.mxu0 0
        %718 = vmatpush.bf16.msra.mxu0 0
        %719 = vmatpush.bf16.msra.mxu0 0
        %720 = vmatpush.bf16.msra.mxu0 0
        %721 = vmatpush.bf16.msra.mxu0 %v712
        %722 = vmatmul.bf16.gmra.mxu0 %v664
        %v723 = vpop.f32.mrf.mxu0
        %v724 = vadd.f32 0.0, %v723
        %v725 = vpop.f32.mrf.mxu0
        %v726 = vadd.f32 0.0, %v725
        %727 = vmatmul.bf16.gmra.mxu0 %v667
        %v728 = vpop.f32.mrf.mxu0
        %v729 = vadd.f32 0.0, %v728
        %v730 = vpop.f32.mrf.mxu0
        %v731 = vadd.f32 0.0, %v730
        %732 = vmatmul.bf16.gmra.mxu0 %v670
        %v733 = vpop.f32.mrf.mxu0
        %v734 = vadd.f32 0.0, %v733
        %v735 = vpop.f32.mrf.mxu0
        %v736 = vadd.f32 0.0, %v735
        %737 = vmatmul.bf16.gmra.mxu0 %v673
        %v738 = vpop.f32.mrf.mxu0
        %v739 = vadd.f32 0.0, %v738
        %v740 = vpop.f32.mrf.mxu0
        %v741 = vadd.f32 0.0, %v740
        %742 = vmatmul.bf16.gmra.mxu0 %v676
        %v743 = vpop.f32.mrf.mxu0
        %v744 = vadd.f32 0.0, %v743
        %v745 = vpop.f32.mrf.mxu0
        %v746 = vadd.f32 0.0, %v745
        %747 = vmatmul.bf16.gmra.mxu0 %v679
        %v748 = vpop.f32.mrf.mxu0
        %v749 = vadd.f32 0.0, %v748
        %v750 = vpop.f32.mrf.mxu0
        %v751 = vadd.f32 0.0, %v750
        %752 = vmatmul.bf16.gmra.mxu0 %v682
        %v753 = vpop.f32.mrf.mxu0
        %v754 = vadd.f32 0.0, %v753
        %v755 = vpop.f32.mrf.mxu0
        %v756 = vadd.f32 0.0, %v755
        %757 = vmatmul.bf16.gmra.mxu0 %v685
        %v758 = vpop.f32.mrf.mxu0
        %v759 = vadd.f32 0.0, %v758
        %v760 = vpop.f32.mrf.mxu0
        %v761 = vadd.f32 0.0, %v760
        %762 = vmatmul.bf16.gmra.mxu0 %v688
        %v763 = vpop.f32.mrf.mxu0
        %v764 = vadd.f32 0.0, %v763
        %v765 = vpop.f32.mrf.mxu0
        %v766 = vadd.f32 0.0, %v765
        %767 = vmatmul.bf16.gmra.mxu0 %v691
        %v768 = vpop.f32.mrf.mxu0
        %v769 = vadd.f32 0.0, %v768
        %v770 = vpop.f32.mrf.mxu0
        %v771 = vadd.f32 0.0, %v770
        %772 = vmatmul.bf16.gmra.mxu0 %v694
        %v773 = vpop.f32.mrf.mxu0
        %v774 = vadd.f32 0.0, %v773
        %v775 = vpop.f32.mrf.mxu0
        %v776 = vadd.f32 0.0, %v775
        %777 = vmatmul.bf16.gmra.mxu0 %v697
        %v778 = vpop.f32.mrf.mxu0
        %v779 = vadd.f32 0.0, %v778
        %v780 = vpop.f32.mrf.mxu0
        %v781 = vadd.f32 0.0, %v780
        %782 = vmatmul.bf16.gmra.mxu0 %v700
        %v783 = vpop.f32.mrf.mxu0
        %v784 = vadd.f32 0.0, %v783
        %v785 = vpop.f32.mrf.mxu0
        %v786 = vadd.f32 0.0, %v785
        %787 = vmatmul.bf16.gmra.mxu0 %v703
        %v788 = vpop.f32.mrf.mxu0
        %v789 = vadd.f32 0.0, %v788
        %v790 = vpop.f32.mrf.mxu0
        %v791 = vadd.f32 0.0, %v790
        %792 = vmatmul.bf16.gmra.mxu0 %v706
        %v793 = vpop.f32.mrf.mxu0
        %v794 = vadd.f32 0.0, %v793
        %v795 = vpop.f32.mrf.mxu0
        %v796 = vadd.f32 0.0, %v795
        %797 = vmatmul.bf16.gmra.mxu0 %v709
        %v798 = vpop.f32.mrf.mxu0
        %v799 = vadd.f32 0.0, %v798
        %v800 = vpop.f32.mrf.mxu0
        %v801 = vadd.f32 0.0, %v800
        %802 = vdwg.mxu0
        %v803 = vadd.f32 %v532, %v724
        %v804 = vadd.f32 %v534, %v726
        %v805 = vadd.f32 %v537, %v729
        %v806 = vadd.f32 %v539, %v731
        %v807 = vadd.f32 %v542, %v734
        %v808 = vadd.f32 %v544, %v736
        %v809 = vadd.f32 %v547, %v739
        %v810 = vadd.f32 %v549, %v741
        %v811 = vadd.f32 %v552, %v744
        %v812 = vadd.f32 %v554, %v746
        %v813 = vadd.f32 %v557, %v749
        %v814 = vadd.f32 %v559, %v751
        %v815 = vadd.f32 %v562, %v754
        %v816 = vadd.f32 %v564, %v756
        %v817 = vadd.f32 %v567, %v759
        %v818 = vadd.f32 %v569, %v761
        %v819 = vadd.f32 %v572, %v764
        %v820 = vadd.f32 %v574, %v766
        %v821 = vadd.f32 %v577, %v769
        %v822 = vadd.f32 %v579, %v771
        %v823 = vadd.f32 %v582, %v774
        %v824 = vadd.f32 %v584, %v776
        %v825 = vadd.f32 %v587, %v779
        %v826 = vadd.f32 %v589, %v781
        %v827 = vadd.f32 %v592, %v784
        %v828 = vadd.f32 %v594, %v786
        %v829 = vadd.f32 %v597, %v789
        %v830 = vadd.f32 %v599, %v791
        %v831 = vadd.f32 %v602, %v794
        %v832 = vadd.f32 %v604, %v796
        %v833 = vadd.f32 %v607, %v799
        %v834 = vadd.f32 %v609, %v801
        %s835 = scalar_lea.vmem %s206, 24
        %v836 = vld [vmem:[%s835] sm:$0xff]
        %v837 = vld [vmem:[%s835 + $0x8] sm:$0xff]
        %v838 = vld [vmem:[%s835 + $0x18] sm:$0xff]
        %v839 = vld [vmem:[%s835 + $0x20] sm:$0xff]
        %v840 = vld [vmem:[%s835 + $0x30] sm:$0xff]
        %v841 = vld [vmem:[%s835 + $0x38] sm:$0xff]
        %v842 = vld [vmem:[%s835 + $0x48] sm:$0xff]
        %v843 = vld [vmem:[%s835 + $0x50] sm:$0xff]
        %v844 = vld [vmem:[%s835 + $0x60] sm:$0xff]
        %v845 = vld [vmem:[%s835 + $0x68] sm:$0xff]
        %v846 = vld [vmem:[%s835 + $0x78] sm:$0xff]
        %v847 = vld [vmem:[%s835 + $0x80] sm:$0xff]
        %v848 = vld [vmem:[%s835 + $0x90] sm:$0xff]
        %v849 = vld [vmem:[%s835 + $0x98] sm:$0xff]
        %v850 = vld [vmem:[%s835 + $0xa8] sm:$0xff]
        %v851 = vld [vmem:[%s835 + $0xb0] sm:$0xff]
        %v852 = vld [vmem:[%s835 + $0xc0] sm:$0xff]
        %v853 = vld [vmem:[%s835 + $0xc8] sm:$0xff]
        %v854 = vld [vmem:[%s835 + $0xd8] sm:$0xff]
        %v855 = vld [vmem:[%s835 + $0xe0] sm:$0xff]
        %v856 = vld [vmem:[%s835 + $0xf0] sm:$0xff]
        %v857 = vld [vmem:[%s835 + $0xf8] sm:$0xff]
        %v858 = vld [vmem:[%s835 + $0x108] sm:$0xff]
        %v859 = vld [vmem:[%s835 + $0x110] sm:$0xff]
        %v860 = vld [vmem:[%s835 + $0x120] sm:$0xff]
        %v861 = vld [vmem:[%s835 + $0x128] sm:$0xff]
        %v862 = vld [vmem:[%s835 + $0x138] sm:$0xff]
        %v863 = vld [vmem:[%s835 + $0x140] sm:$0xff]
        %v864 = vld [vmem:[%s835 + $0x150] sm:$0xff]
        %v865 = vld [vmem:[%s835 + $0x158] sm:$0xff]
        %v866 = vld [vmem:[%s835 + $0x168] sm:$0xff]
        %v867 = vld [vmem:[%s835 + $0x170] sm:$0xff]
        %v868 = vpack.c.bf16 %v837, %v836
        %v869 = vpack.c.bf16 %v839, %v838
        %v870 = vpack.c.bf16 %v841, %v840
        %v871 = vpack.c.bf16 %v843, %v842
        %v872 = vpack.c.bf16 %v845, %v844
        %v873 = vpack.c.bf16 %v847, %v846
        %v874 = vpack.c.bf16 %v849, %v848
        %v875 = vpack.c.bf16 %v851, %v850
        %v876 = vpack.c.bf16 %v853, %v852
        %v877 = vpack.c.bf16 %v855, %v854
        %v878 = vpack.c.bf16 %v857, %v856
        %v879 = vpack.c.bf16 %v859, %v858
        %v880 = vpack.c.bf16 %v861, %v860
        %v881 = vpack.c.bf16 %v863, %v862
        %v882 = vpack.c.bf16 %v865, %v864
        %v883 = vpack.c.bf16 %v867, %v866
        %v884 = vpack.c.b16 %v660, %v660
        %v886 = vshrl.u32 %v884, 16
        %v888 = vshll.u32 %v884, 16
        %v890 = vrot.slane %v888, 1
        %v891 = vor.u32 %v886, %v890
        %v893 = vsel %vm326, %v868, 0
        %v896 = vsel %vm326, %v869, 0
        %v899 = vsel %vm326, %v870, 0
        %v902 = vsel %vm326, %v871, 0
        %v905 = vsel %vm326, %v872, 0
        %v908 = vsel %vm326, %v873, 0
        %v911 = vsel %vm326, %v874, 0
        %v914 = vsel %vm326, %v875, 0
        %v917 = vsel %vm326, %v876, 0
        %v920 = vsel %vm326, %v877, 0
        %v923 = vsel %vm326, %v878, 0
        %v926 = vsel %vm326, %v879, 0
        %v929 = vsel %vm326, %v880, 0
        %v932 = vsel %vm326, %v881, 0
        %v935 = vsel %vm326, %v882, 0
        %v938 = vsel %vm326, %v883, 0
        %v941 = vand.u32 %v891, %v378
        %943 = vmatpush.bf16.msra.mxu0 0
        %944 = vmatpush.bf16.msra.mxu0 0
        %945 = vmatpush.bf16.msra.mxu0 0
        %946 = vmatpush.bf16.msra.mxu0 0
        %947 = vmatpush.bf16.msra.mxu0 0
        %948 = vmatpush.bf16.msra.mxu0 0
        %949 = vmatpush.bf16.msra.mxu0 0
        %950 = vmatpush.bf16.msra.mxu0 %v941
        %951 = vmatmul.bf16.gmra.mxu0 %v893
        %v952 = vpop.f32.mrf.mxu0
        %v953 = vadd.f32 0.0, %v952
        %v954 = vpop.f32.mrf.mxu0
        %v955 = vadd.f32 0.0, %v954
        %956 = vmatmul.bf16.gmra.mxu0 %v896
        %v957 = vpop.f32.mrf.mxu0
        %v958 = vadd.f32 0.0, %v957
        %v959 = vpop.f32.mrf.mxu0
        %v960 = vadd.f32 0.0, %v959
        %961 = vmatmul.bf16.gmra.mxu0 %v899
        %v962 = vpop.f32.mrf.mxu0
        %v963 = vadd.f32 0.0, %v962
        %v964 = vpop.f32.mrf.mxu0
        %v965 = vadd.f32 0.0, %v964
        %966 = vmatmul.bf16.gmra.mxu0 %v902
        %v967 = vpop.f32.mrf.mxu0
        %v968 = vadd.f32 0.0, %v967
        %v969 = vpop.f32.mrf.mxu0
        %v970 = vadd.f32 0.0, %v969
        %971 = vmatmul.bf16.gmra.mxu0 %v905
        %v972 = vpop.f32.mrf.mxu0
        %v973 = vadd.f32 0.0, %v972
        %v974 = vpop.f32.mrf.mxu0
        %v975 = vadd.f32 0.0, %v974
        %976 = vmatmul.bf16.gmra.mxu0 %v908
        %v977 = vpop.f32.mrf.mxu0
        %v978 = vadd.f32 0.0, %v977
        %v979 = vpop.f32.mrf.mxu0
        %v980 = vadd.f32 0.0, %v979
        %981 = vmatmul.bf16.gmra.mxu0 %v911
        %v982 = vpop.f32.mrf.mxu0
        %v983 = vadd.f32 0.0, %v982
        %v984 = vpop.f32.mrf.mxu0
        %v985 = vadd.f32 0.0, %v984
        %986 = vmatmul.bf16.gmra.mxu0 %v914
        %v987 = vpop.f32.mrf.mxu0
        %v988 = vadd.f32 0.0, %v987
        %v989 = vpop.f32.mrf.mxu0
        %v990 = vadd.f32 0.0, %v989
        %991 = vmatmul.bf16.gmra.mxu0 %v917
        %v992 = vpop.f32.mrf.mxu0
        %v993 = vadd.f32 0.0, %v992
        %v994 = vpop.f32.mrf.mxu0
        %v995 = vadd.f32 0.0, %v994
        %996 = vmatmul.bf16.gmra.mxu0 %v920
        %v997 = vpop.f32.mrf.mxu0
        %v998 = vadd.f32 0.0, %v997
        %v999 = vpop.f32.mrf.mxu0
        %v1000 = vadd.f32 0.0, %v999
        %1001 = vmatmul.bf16.gmra.mxu0 %v923
        %v1002 = vpop.f32.mrf.mxu0
        %v1003 = vadd.f32 0.0, %v1002
        %v1004 = vpop.f32.mrf.mxu0
        %v1005 = vadd.f32 0.0, %v1004
        %1006 = vmatmul.bf16.gmra.mxu0 %v926
        %v1007 = vpop.f32.mrf.mxu0
        %v1008 = vadd.f32 0.0, %v1007
        %v1009 = vpop.f32.mrf.mxu0
        %v1010 = vadd.f32 0.0, %v1009
        %1011 = vmatmul.bf16.gmra.mxu0 %v929
        %v1012 = vpop.f32.mrf.mxu0
        %v1013 = vadd.f32 0.0, %v1012
        %v1014 = vpop.f32.mrf.mxu0
        %v1015 = vadd.f32 0.0, %v1014
        %1016 = vmatmul.bf16.gmra.mxu0 %v932
        %v1017 = vpop.f32.mrf.mxu0
        %v1018 = vadd.f32 0.0, %v1017
        %v1019 = vpop.f32.mrf.mxu0
        %v1020 = vadd.f32 0.0, %v1019
        %1021 = vmatmul.bf16.gmra.mxu0 %v935
        %v1022 = vpop.f32.mrf.mxu0
        %v1023 = vadd.f32 0.0, %v1022
        %v1024 = vpop.f32.mrf.mxu0
        %v1025 = vadd.f32 0.0, %v1024
        %1026 = vmatmul.bf16.gmra.mxu0 %v938
        %v1027 = vpop.f32.mrf.mxu0
        %v1028 = vadd.f32 0.0, %v1027
        %v1029 = vpop.f32.mrf.mxu0
        %v1030 = vadd.f32 0.0, %v1029
        %1031 = vdwg.mxu0
        %v1032 = vadd.f32 %v803, %v953
        %v1033 = vadd.f32 %v804, %v955
        %v1034 = vadd.f32 %v805, %v958
        %v1035 = vadd.f32 %v806, %v960
        %v1036 = vadd.f32 %v807, %v963
        %v1037 = vadd.f32 %v808, %v965
        %v1038 = vadd.f32 %v809, %v968
        %v1039 = vadd.f32 %v810, %v970
        %v1040 = vadd.f32 %v811, %v973
        %v1041 = vadd.f32 %v812, %v975
        %v1042 = vadd.f32 %v813, %v978
        %v1043 = vadd.f32 %v814, %v980
        %v1044 = vadd.f32 %v815, %v983
        %v1045 = vadd.f32 %v816, %v985
        %v1046 = vadd.f32 %v817, %v988
        %v1047 = vadd.f32 %v818, %v990
        %v1048 = vadd.f32 %v819, %v993
        %v1049 = vadd.f32 %v820, %v995
        %v1050 = vadd.f32 %v821, %v998
        %v1051 = vadd.f32 %v822, %v1000
        %v1052 = vadd.f32 %v823, %v1003
        %v1053 = vadd.f32 %v824, %v1005
        %v1054 = vadd.f32 %v825, %v1008
        %v1055 = vadd.f32 %v826, %v1010
        %v1056 = vadd.f32 %v827, %v1013
        %v1057 = vadd.f32 %v828, %v1015
        %v1058 = vadd.f32 %v829, %v1018
        %v1059 = vadd.f32 %v830, %v1020
        %v1060 = vadd.f32 %v831, %v1023
        %v1061 = vadd.f32 %v832, %v1025
        %v1062 = vadd.f32 %v833, %v1028
        %v1063 = vadd.f32 %v834, %v1030
        %v1064 = vld [vmem:[%s835 + $0x1] sm:$0xff]
        %v1065 = vld [vmem:[%s835 + $0x9] sm:$0xff]
        %v1066 = vld [vmem:[%s835 + $0x19] sm:$0xff]
        %v1067 = vld [vmem:[%s835 + $0x21] sm:$0xff]
        %v1068 = vld [vmem:[%s835 + $0x31] sm:$0xff]
        %v1069 = vld [vmem:[%s835 + $0x39] sm:$0xff]
        %v1070 = vld [vmem:[%s835 + $0x49] sm:$0xff]
        %v1071 = vld [vmem:[%s835 + $0x51] sm:$0xff]
        %v1072 = vld [vmem:[%s835 + $0x61] sm:$0xff]
        %v1073 = vld [vmem:[%s835 + $0x69] sm:$0xff]
        %v1074 = vld [vmem:[%s835 + $0x79] sm:$0xff]
        %v1075 = vld [vmem:[%s835 + $0x81] sm:$0xff]
        %v1076 = vld [vmem:[%s835 + $0x91] sm:$0xff]
        %v1077 = vld [vmem:[%s835 + $0x99] sm:$0xff]
        %v1078 = vld [vmem:[%s835 + $0xa9] sm:$0xff]
        %v1079 = vld [vmem:[%s835 + $0xb1] sm:$0xff]
        %v1080 = vld [vmem:[%s835 + $0xc1] sm:$0xff]
        %v1081 = vld [vmem:[%s835 + $0xc9] sm:$0xff]
        %v1082 = vld [vmem:[%s835 + $0xd9] sm:$0xff]
        %v1083 = vld [vmem:[%s835 + $0xe1] sm:$0xff]
        %v1084 = vld [vmem:[%s835 + $0xf1] sm:$0xff]
        %v1085 = vld [vmem:[%s835 + $0xf9] sm:$0xff]
        %v1086 = vld [vmem:[%s835 + $0x109] sm:$0xff]
        %v1087 = vld [vmem:[%s835 + $0x111] sm:$0xff]
        %v1088 = vld [vmem:[%s835 + $0x121] sm:$0xff]
        %v1089 = vld [vmem:[%s835 + $0x129] sm:$0xff]
        %v1090 = vld [vmem:[%s835 + $0x139] sm:$0xff]
        %v1091 = vld [vmem:[%s835 + $0x141] sm:$0xff]
        %v1092 = vld [vmem:[%s835 + $0x151] sm:$0xff]
        %v1093 = vld [vmem:[%s835 + $0x159] sm:$0xff]
        %v1094 = vld [vmem:[%s835 + $0x169] sm:$0xff]
        %v1095 = vld [vmem:[%s835 + $0x171] sm:$0xff]
        %v1096 = vpack.c.bf16 %v1065, %v1064
        %v1097 = vpack.c.bf16 %v1067, %v1066
        %v1098 = vpack.c.bf16 %v1069, %v1068
        %v1099 = vpack.c.bf16 %v1071, %v1070
        %v1100 = vpack.c.bf16 %v1073, %v1072
        %v1101 = vpack.c.bf16 %v1075, %v1074
        %v1102 = vpack.c.bf16 %v1077, %v1076
        %v1103 = vpack.c.bf16 %v1079, %v1078
        %v1104 = vpack.c.bf16 %v1081, %v1080
        %v1105 = vpack.c.bf16 %v1083, %v1082
        %v1106 = vpack.c.bf16 %v1085, %v1084
        %v1107 = vpack.c.bf16 %v1087, %v1086
        %v1108 = vpack.c.bf16 %v1089, %v1088
        %v1109 = vpack.c.bf16 %v1091, %v1090
        %v1110 = vpack.c.bf16 %v1093, %v1092
        %v1111 = vpack.c.bf16 %v1095, %v1094
        %v1112 = vrot.slane %v884, 2
        %v1114 = vsel %vm326, %v1096, 0
        %v1117 = vsel %vm326, %v1097, 0
        %v1120 = vsel %vm326, %v1098, 0
        %v1123 = vsel %vm326, %v1099, 0
        %v1126 = vsel %vm326, %v1100, 0
        %v1129 = vsel %vm326, %v1101, 0
        %v1132 = vsel %vm326, %v1102, 0
        %v1135 = vsel %vm326, %v1103, 0
        %v1138 = vsel %vm326, %v1104, 0
        %v1141 = vsel %vm326, %v1105, 0
        %v1144 = vsel %vm326, %v1106, 0
        %v1147 = vsel %vm326, %v1107, 0
        %v1150 = vsel %vm326, %v1108, 0
        %v1153 = vsel %vm326, %v1109, 0
        %v1156 = vsel %vm326, %v1110, 0
        %v1159 = vsel %vm326, %v1111, 0
        %v1162 = vand.u32 %v1112, %v378
        %1164 = vmatpush.bf16.msra.mxu0 0
        %1165 = vmatpush.bf16.msra.mxu0 0
        %1166 = vmatpush.bf16.msra.mxu0 0
        %1167 = vmatpush.bf16.msra.mxu0 0
        %1168 = vmatpush.bf16.msra.mxu0 0
        %1169 = vmatpush.bf16.msra.mxu0 0
        %1170 = vmatpush.bf16.msra.mxu0 0
        %1171 = vmatpush.bf16.msra.mxu0 %v1162
        %1172 = vmatmul.bf16.gmra.mxu0 %v1114
        %v1173 = vpop.f32.mrf.mxu0
        %v1174 = vadd.f32 0.0, %v1173
        %v1175 = vpop.f32.mrf.mxu0
        %v1176 = vadd.f32 0.0, %v1175
        %1177 = vmatmul.bf16.gmra.mxu0 %v1117
        %v1178 = vpop.f32.mrf.mxu0
        %v1179 = vadd.f32 0.0, %v1178
        %v1180 = vpop.f32.mrf.mxu0
        %v1181 = vadd.f32 0.0, %v1180
        %1182 = vmatmul.bf16.gmra.mxu0 %v1120
        %v1183 = vpop.f32.mrf.mxu0
        %v1184 = vadd.f32 0.0, %v1183
        %v1185 = vpop.f32.mrf.mxu0
        %v1186 = vadd.f32 0.0, %v1185
        %1187 = vmatmul.bf16.gmra.mxu0 %v1123
        %v1188 = vpop.f32.mrf.mxu0
        %v1189 = vadd.f32 0.0, %v1188
        %v1190 = vpop.f32.mrf.mxu0
        %v1191 = vadd.f32 0.0, %v1190
        %1192 = vmatmul.bf16.gmra.mxu0 %v1126
        %v1193 = vpop.f32.mrf.mxu0
        %v1194 = vadd.f32 0.0, %v1193
        %v1195 = vpop.f32.mrf.mxu0
        %v1196 = vadd.f32 0.0, %v1195
        %1197 = vmatmul.bf16.gmra.mxu0 %v1129
        %v1198 = vpop.f32.mrf.mxu0
        %v1199 = vadd.f32 0.0, %v1198
        %v1200 = vpop.f32.mrf.mxu0
        %v1201 = vadd.f32 0.0, %v1200
        %1202 = vmatmul.bf16.gmra.mxu0 %v1132
        %v1203 = vpop.f32.mrf.mxu0
        %v1204 = vadd.f32 0.0, %v1203
        %v1205 = vpop.f32.mrf.mxu0
        %v1206 = vadd.f32 0.0, %v1205
        %1207 = vmatmul.bf16.gmra.mxu0 %v1135
        %v1208 = vpop.f32.mrf.mxu0
        %v1209 = vadd.f32 0.0, %v1208
        %v1210 = vpop.f32.mrf.mxu0
        %v1211 = vadd.f32 0.0, %v1210
        %1212 = vmatmul.bf16.gmra.mxu0 %v1138
        %v1213 = vpop.f32.mrf.mxu0
        %v1214 = vadd.f32 0.0, %v1213
        %v1215 = vpop.f32.mrf.mxu0
        %v1216 = vadd.f32 0.0, %v1215
        %1217 = vmatmul.bf16.gmra.mxu0 %v1141
        %v1218 = vpop.f32.mrf.mxu0
        %v1219 = vadd.f32 0.0, %v1218
        %v1220 = vpop.f32.mrf.mxu0
        %v1221 = vadd.f32 0.0, %v1220
        %1222 = vmatmul.bf16.gmra.mxu0 %v1144
        %v1223 = vpop.f32.mrf.mxu0
        %v1224 = vadd.f32 0.0, %v1223
        %v1225 = vpop.f32.mrf.mxu0
        %v1226 = vadd.f32 0.0, %v1225
        %1227 = vmatmul.bf16.gmra.mxu0 %v1147
        %v1228 = vpop.f32.mrf.mxu0
        %v1229 = vadd.f32 0.0, %v1228
        %v1230 = vpop.f32.mrf.mxu0
        %v1231 = vadd.f32 0.0, %v1230
        %1232 = vmatmul.bf16.gmra.mxu0 %v1150
        %v1233 = vpop.f32.mrf.mxu0
        %v1234 = vadd.f32 0.0, %v1233
        %v1235 = vpop.f32.mrf.mxu0
        %v1236 = vadd.f32 0.0, %v1235
        %1237 = vmatmul.bf16.gmra.mxu0 %v1153
        %v1238 = vpop.f32.mrf.mxu0
        %v1239 = vadd.f32 0.0, %v1238
        %v1240 = vpop.f32.mrf.mxu0
        %v1241 = vadd.f32 0.0, %v1240
        %1242 = vmatmul.bf16.gmra.mxu0 %v1156
        %v1243 = vpop.f32.mrf.mxu0
        %v1244 = vadd.f32 0.0, %v1243
        %v1245 = vpop.f32.mrf.mxu0
        %v1246 = vadd.f32 0.0, %v1245
        %1247 = vmatmul.bf16.gmra.mxu0 %v1159
        %v1248 = vpop.f32.mrf.mxu0
        %v1249 = vadd.f32 0.0, %v1248
        %v1250 = vpop.f32.mrf.mxu0
        %v1251 = vadd.f32 0.0, %v1250
        %1252 = vdwg.mxu0
        %v1253 = vadd.f32 %v1032, %v1174
        %v1254 = vadd.f32 %v1033, %v1176
        %v1255 = vadd.f32 %v1034, %v1179
        %v1256 = vadd.f32 %v1035, %v1181
        %v1257 = vadd.f32 %v1036, %v1184
        %v1258 = vadd.f32 %v1037, %v1186
        %v1259 = vadd.f32 %v1038, %v1189
        %v1260 = vadd.f32 %v1039, %v1191
        %v1261 = vadd.f32 %v1040, %v1194
        %v1262 = vadd.f32 %v1041, %v1196
        %v1263 = vadd.f32 %v1042, %v1199
        %v1264 = vadd.f32 %v1043, %v1201
        %v1265 = vadd.f32 %v1044, %v1204
        %v1266 = vadd.f32 %v1045, %v1206
        %v1267 = vadd.f32 %v1046, %v1209
        %v1268 = vadd.f32 %v1047, %v1211
        %v1269 = vadd.f32 %v1048, %v1214
        %v1270 = vadd.f32 %v1049, %v1216
        %v1271 = vadd.f32 %v1050, %v1219
        %v1272 = vadd.f32 %v1051, %v1221
        %v1273 = vadd.f32 %v1052, %v1224
        %v1274 = vadd.f32 %v1053, %v1226
        %v1275 = vadd.f32 %v1054, %v1229
        %v1276 = vadd.f32 %v1055, %v1231
        %v1277 = vadd.f32 %v1056, %v1234
        %v1278 = vadd.f32 %v1057, %v1236
        %v1279 = vadd.f32 %v1058, %v1239
        %v1280 = vadd.f32 %v1059, %v1241
        %v1281 = vadd.f32 %v1060, %v1244
        %v1282 = vadd.f32 %v1061, %v1246
        %v1283 = vadd.f32 %v1062, %v1249
        %v1284 = vadd.f32 %v1063, %v1251
        %v1285 = vld [vmem:[%s835 + $0x2] sm:$0xff]
        %v1286 = vld [vmem:[%s835 + $0xa] sm:$0xff]
        %v1287 = vld [vmem:[%s835 + $0x1a] sm:$0xff]
        %v1288 = vld [vmem:[%s835 + $0x22] sm:$0xff]
        %v1289 = vld [vmem:[%s835 + $0x32] sm:$0xff]
        %v1290 = vld [vmem:[%s835 + $0x3a] sm:$0xff]
        %v1291 = vld [vmem:[%s835 + $0x4a] sm:$0xff]
        %v1292 = vld [vmem:[%s835 + $0x52] sm:$0xff]
        %v1293 = vld [vmem:[%s835 + $0x62] sm:$0xff]
        %v1294 = vld [vmem:[%s835 + $0x6a] sm:$0xff]
        %v1295 = vld [vmem:[%s835 + $0x7a] sm:$0xff]
        %v1296 = vld [vmem:[%s835 + $0x82] sm:$0xff]
        %v1297 = vld [vmem:[%s835 + $0x92] sm:$0xff]
        %v1298 = vld [vmem:[%s835 + $0x9a] sm:$0xff]
        %v1299 = vld [vmem:[%s835 + $0xaa] sm:$0xff]
        %v1300 = vld [vmem:[%s835 + $0xb2] sm:$0xff]
        %v1301 = vld [vmem:[%s835 + $0xc2] sm:$0xff]
        %v1302 = vld [vmem:[%s835 + $0xca] sm:$0xff]
        %v1303 = vld [vmem:[%s835 + $0xda] sm:$0xff]
        %v1304 = vld [vmem:[%s835 + $0xe2] sm:$0xff]
        %v1305 = vld [vmem:[%s835 + $0xf2] sm:$0xff]
        %v1306 = vld [vmem:[%s835 + $0xfa] sm:$0xff]
        %v1307 = vld [vmem:[%s835 + $0x10a] sm:$0xff]
        %v1308 = vld [vmem:[%s835 + $0x112] sm:$0xff]
        %v1309 = vld [vmem:[%s835 + $0x122] sm:$0xff]
        %v1310 = vld [vmem:[%s835 + $0x12a] sm:$0xff]
        %v1311 = vld [vmem:[%s835 + $0x13a] sm:$0xff]
        %v1312 = vld [vmem:[%s835 + $0x142] sm:$0xff]
        %v1313 = vld [vmem:[%s835 + $0x152] sm:$0xff]
        %v1314 = vld [vmem:[%s835 + $0x15a] sm:$0xff]
        %v1315 = vld [vmem:[%s835 + $0x16a] sm:$0xff]
        %v1316 = vld [vmem:[%s835 + $0x172] sm:$0xff]
        %v1317 = vpack.c.bf16 %v1286, %v1285
        %v1318 = vpack.c.bf16 %v1288, %v1287
        %v1319 = vpack.c.bf16 %v1290, %v1289
        %v1320 = vpack.c.bf16 %v1292, %v1291
        %v1321 = vpack.c.bf16 %v1294, %v1293
        %v1322 = vpack.c.bf16 %v1296, %v1295
        %v1323 = vpack.c.bf16 %v1298, %v1297
        %v1324 = vpack.c.bf16 %v1300, %v1299
        %v1325 = vpack.c.bf16 %v1302, %v1301
        %v1326 = vpack.c.bf16 %v1304, %v1303
        %v1327 = vpack.c.bf16 %v1306, %v1305
        %v1328 = vpack.c.bf16 %v1308, %v1307
        %v1329 = vpack.c.bf16 %v1310, %v1309
        %v1330 = vpack.c.bf16 %v1312, %v1311
        %v1331 = vpack.c.bf16 %v1314, %v1313
        %v1332 = vpack.c.bf16 %v1316, %v1315
        %v1334 = vunpack.c.l.b16 %v217
        %v1335 = vpack.c.b16 %v1334, %v660
        %v1337 = vshrl.u32 %v1335, 16
        %v1339 = vrot.slane %v1337, 3
        %v1340 = vshll.u32 %v1335, 16
        %v1342 = vrot.slane %v1340, 4
        %v1343 = vor.u32 %v1339, %v1342
        %v1345 = vsel %vm326, %v1317, 0
        %v1348 = vsel %vm326, %v1318, 0
        %v1351 = vsel %vm326, %v1319, 0
        %v1354 = vsel %vm326, %v1320, 0
        %v1357 = vsel %vm326, %v1321, 0
        %v1360 = vsel %vm326, %v1322, 0
        %v1363 = vsel %vm326, %v1323, 0
        %v1366 = vsel %vm326, %v1324, 0
        %v1369 = vsel %vm326, %v1325, 0
        %v1372 = vsel %vm326, %v1326, 0
        %v1375 = vsel %vm326, %v1327, 0
        %v1378 = vsel %vm326, %v1328, 0
        %v1381 = vsel %vm326, %v1329, 0
        %v1384 = vsel %vm326, %v1330, 0
        %v1387 = vsel %vm326, %v1331, 0
        %v1390 = vsel %vm326, %v1332, 0
        %v1393 = vand.u32 %v1343, %v378
        %1395 = vmatpush.bf16.msra.mxu0 0
        %1396 = vmatpush.bf16.msra.mxu0 0
        %1397 = vmatpush.bf16.msra.mxu0 0
        %1398 = vmatpush.bf16.msra.mxu0 0
        %1399 = vmatpush.bf16.msra.mxu0 0
        %1400 = vmatpush.bf16.msra.mxu0 0
        %1401 = vmatpush.bf16.msra.mxu0 0
        %1402 = vmatpush.bf16.msra.mxu0 %v1393
        %1403 = vmatmul.bf16.gmra.mxu0 %v1345
        %v1404 = vpop.f32.mrf.mxu0
        %v1405 = vadd.f32 0.0, %v1404
        %v1406 = vpop.f32.mrf.mxu0
        %v1407 = vadd.f32 0.0, %v1406
        %1408 = vmatmul.bf16.gmra.mxu0 %v1348
        %v1409 = vpop.f32.mrf.mxu0
        %v1410 = vadd.f32 0.0, %v1409
        %v1411 = vpop.f32.mrf.mxu0
        %v1412 = vadd.f32 0.0, %v1411
        %1413 = vmatmul.bf16.gmra.mxu0 %v1351
        %v1414 = vpop.f32.mrf.mxu0
        %v1415 = vadd.f32 0.0, %v1414
        %v1416 = vpop.f32.mrf.mxu0
        %v1417 = vadd.f32 0.0, %v1416
        %1418 = vmatmul.bf16.gmra.mxu0 %v1354
        %v1419 = vpop.f32.mrf.mxu0
        %v1420 = vadd.f32 0.0, %v1419
        %v1421 = vpop.f32.mrf.mxu0
        %v1422 = vadd.f32 0.0, %v1421
        %1423 = vmatmul.bf16.gmra.mxu0 %v1357
        %v1424 = vpop.f32.mrf.mxu0
        %v1425 = vadd.f32 0.0, %v1424
        %v1426 = vpop.f32.mrf.mxu0
        %v1427 = vadd.f32 0.0, %v1426
        %1428 = vmatmul.bf16.gmra.mxu0 %v1360
        %v1429 = vpop.f32.mrf.mxu0
        %v1430 = vadd.f32 0.0, %v1429
        %v1431 = vpop.f32.mrf.mxu0
        %v1432 = vadd.f32 0.0, %v1431
        %1433 = vmatmul.bf16.gmra.mxu0 %v1363
        %v1434 = vpop.f32.mrf.mxu0
        %v1435 = vadd.f32 0.0, %v1434
        %v1436 = vpop.f32.mrf.mxu0
        %v1437 = vadd.f32 0.0, %v1436
        %1438 = vmatmul.bf16.gmra.mxu0 %v1366
        %v1439 = vpop.f32.mrf.mxu0
        %v1440 = vadd.f32 0.0, %v1439
        %v1441 = vpop.f32.mrf.mxu0
        %v1442 = vadd.f32 0.0, %v1441
        %1443 = vmatmul.bf16.gmra.mxu0 %v1369
        %v1444 = vpop.f32.mrf.mxu0
        %v1445 = vadd.f32 0.0, %v1444
        %v1446 = vpop.f32.mrf.mxu0
        %v1447 = vadd.f32 0.0, %v1446
        %1448 = vmatmul.bf16.gmra.mxu0 %v1372
        %v1449 = vpop.f32.mrf.mxu0
        %v1450 = vadd.f32 0.0, %v1449
        %v1451 = vpop.f32.mrf.mxu0
        %v1452 = vadd.f32 0.0, %v1451
        %1453 = vmatmul.bf16.gmra.mxu0 %v1375
        %v1454 = vpop.f32.mrf.mxu0
        %v1455 = vadd.f32 0.0, %v1454
        %v1456 = vpop.f32.mrf.mxu0
        %v1457 = vadd.f32 0.0, %v1456
        %1458 = vmatmul.bf16.gmra.mxu0 %v1378
        %v1459 = vpop.f32.mrf.mxu0
        %v1460 = vadd.f32 0.0, %v1459
        %v1461 = vpop.f32.mrf.mxu0
        %v1462 = vadd.f32 0.0, %v1461
        %1463 = vmatmul.bf16.gmra.mxu0 %v1381
        %v1464 = vpop.f32.mrf.mxu0
        %v1465 = vadd.f32 0.0, %v1464
        %v1466 = vpop.f32.mrf.mxu0
        %v1467 = vadd.f32 0.0, %v1466
        %1468 = vmatmul.bf16.gmra.mxu0 %v1384
        %v1469 = vpop.f32.mrf.mxu0
        %v1470 = vadd.f32 0.0, %v1469
        %v1471 = vpop.f32.mrf.mxu0
        %v1472 = vadd.f32 0.0, %v1471
        %1473 = vmatmul.bf16.gmra.mxu0 %v1387
        %v1474 = vpop.f32.mrf.mxu0
        %v1475 = vadd.f32 0.0, %v1474
        %v1476 = vpop.f32.mrf.mxu0
        %v1477 = vadd.f32 0.0, %v1476
        %1478 = vmatmul.bf16.gmra.mxu0 %v1390
        %v1479 = vpop.f32.mrf.mxu0
        %v1480 = vadd.f32 0.0, %v1479
        %v1481 = vpop.f32.mrf.mxu0
        %v1482 = vadd.f32 0.0, %v1481
        %1483 = vdwg.mxu0
        %v1484 = vadd.f32 %v1253, %v1405
        %v1485 = vadd.f32 %v1254, %v1407
        %v1486 = vadd.f32 %v1255, %v1410
        %v1487 = vadd.f32 %v1256, %v1412
        %v1488 = vadd.f32 %v1257, %v1415
        %v1489 = vadd.f32 %v1258, %v1417
        %v1490 = vadd.f32 %v1259, %v1420
        %v1491 = vadd.f32 %v1260, %v1422
        %v1492 = vadd.f32 %v1261, %v1425
        %v1493 = vadd.f32 %v1262, %v1427
        %v1494 = vadd.f32 %v1263, %v1430
        %v1495 = vadd.f32 %v1264, %v1432
        %v1496 = vadd.f32 %v1265, %v1435
        %v1497 = vadd.f32 %v1266, %v1437
        %v1498 = vadd.f32 %v1267, %v1440
        %v1499 = vadd.f32 %v1268, %v1442
        %v1500 = vadd.f32 %v1269, %v1445
        %v1501 = vadd.f32 %v1270, %v1447
        %v1502 = vadd.f32 %v1271, %v1450
        %v1503 = vadd.f32 %v1272, %v1452
        %v1504 = vadd.f32 %v1273, %v1455
        %v1505 = vadd.f32 %v1274, %v1457
        %v1506 = vadd.f32 %v1275, %v1460
        %v1507 = vadd.f32 %v1276, %v1462
        %v1508 = vadd.f32 %v1277, %v1465
        %v1509 = vadd.f32 %v1278, %v1467
        %v1510 = vadd.f32 %v1279, %v1470
        %v1511 = vadd.f32 %v1280, %v1472
        %v1512 = vadd.f32 %v1281, %v1475
        %v1513 = vadd.f32 %v1282, %v1477
        %v1514 = vadd.f32 %v1283, %v1480
        %v1515 = vadd.f32 %v1284, %v1482
        %s1516 = scalar_lea.vmem %s206, 48
        %v1517 = vld [vmem:[%s1516] sm:$0xff]
        %v1518 = vld [vmem:[%s1516 + $0x8] sm:$0xff]
        %v1519 = vld [vmem:[%s1516 + $0x18] sm:$0xff]
        %v1520 = vld [vmem:[%s1516 + $0x20] sm:$0xff]
        %v1521 = vld [vmem:[%s1516 + $0x30] sm:$0xff]
        %v1522 = vld [vmem:[%s1516 + $0x38] sm:$0xff]
        %v1523 = vld [vmem:[%s1516 + $0x48] sm:$0xff]
        %v1524 = vld [vmem:[%s1516 + $0x50] sm:$0xff]
        %v1525 = vld [vmem:[%s1516 + $0x60] sm:$0xff]
        %v1526 = vld [vmem:[%s1516 + $0x68] sm:$0xff]
        %v1527 = vld [vmem:[%s1516 + $0x78] sm:$0xff]
        %v1528 = vld [vmem:[%s1516 + $0x80] sm:$0xff]
        %v1529 = vld [vmem:[%s1516 + $0x90] sm:$0xff]
        %v1530 = vld [vmem:[%s1516 + $0x98] sm:$0xff]
        %v1531 = vld [vmem:[%s1516 + $0xa8] sm:$0xff]
        %v1532 = vld [vmem:[%s1516 + $0xb0] sm:$0xff]
        %v1533 = vld [vmem:[%s1516 + $0xc0] sm:$0xff]
        %v1534 = vld [vmem:[%s1516 + $0xc8] sm:$0xff]
        %v1535 = vld [vmem:[%s1516 + $0xd8] sm:$0xff]
        %v1536 = vld [vmem:[%s1516 + $0xe0] sm:$0xff]
        %v1537 = vld [vmem:[%s1516 + $0xf0] sm:$0xff]
        %v1538 = vld [vmem:[%s1516 + $0xf8] sm:$0xff]
        %v1539 = vld [vmem:[%s1516 + $0x108] sm:$0xff]
        %v1540 = vld [vmem:[%s1516 + $0x110] sm:$0xff]
        %v1541 = vld [vmem:[%s1516 + $0x120] sm:$0xff]
        %v1542 = vld [vmem:[%s1516 + $0x128] sm:$0xff]
        %v1543 = vld [vmem:[%s1516 + $0x138] sm:$0xff]
        %v1544 = vld [vmem:[%s1516 + $0x140] sm:$0xff]
        %v1545 = vld [vmem:[%s1516 + $0x150] sm:$0xff]
        %v1546 = vld [vmem:[%s1516 + $0x158] sm:$0xff]
        %v1547 = vld [vmem:[%s1516 + $0x168] sm:$0xff]
        %v1548 = vld [vmem:[%s1516 + $0x170] sm:$0xff]
        %v1549 = vpack.c.bf16 %v1518, %v1517
        %v1550 = vpack.c.bf16 %v1520, %v1519
        %v1551 = vpack.c.bf16 %v1522, %v1521
        %v1552 = vpack.c.bf16 %v1524, %v1523
        %v1553 = vpack.c.bf16 %v1526, %v1525
        %v1554 = vpack.c.bf16 %v1528, %v1527
        %v1555 = vpack.c.bf16 %v1530, %v1529
        %v1556 = vpack.c.bf16 %v1532, %v1531
        %v1557 = vpack.c.bf16 %v1534, %v1533
        %v1558 = vpack.c.bf16 %v1536, %v1535
        %v1559 = vpack.c.bf16 %v1538, %v1537
        %v1560 = vpack.c.bf16 %v1540, %v1539
        %v1561 = vpack.c.bf16 %v1542, %v1541
        %v1562 = vpack.c.bf16 %v1544, %v1543
        %v1563 = vpack.c.bf16 %v1546, %v1545
        %v1564 = vpack.c.bf16 %v1548, %v1547
        %v1565 = vpack.c.b16 %v1334, %v1334
        %v1566 = vrot.slane %v1565, 1
        %v1568 = vsel %vm326, %v1549, 0
        %v1571 = vsel %vm326, %v1550, 0
        %v1574 = vsel %vm326, %v1551, 0
        %v1577 = vsel %vm326, %v1552, 0
        %v1580 = vsel %vm326, %v1553, 0
        %v1583 = vsel %vm326, %v1554, 0
        %v1586 = vsel %vm326, %v1555, 0
        %v1589 = vsel %vm326, %v1556, 0
        %v1592 = vsel %vm326, %v1557, 0
        %v1595 = vsel %vm326, %v1558, 0
        %v1598 = vsel %vm326, %v1559, 0
        %v1601 = vsel %vm326, %v1560, 0
        %v1604 = vsel %vm326, %v1561, 0
        %v1607 = vsel %vm326, %v1562, 0
        %v1610 = vsel %vm326, %v1563, 0
        %v1613 = vsel %vm326, %v1564, 0
        %v1616 = vand.u32 %v1566, %v378
        %1618 = vmatpush.bf16.msra.mxu0 0
        %1619 = vmatpush.bf16.msra.mxu0 0
        %1620 = vmatpush.bf16.msra.mxu0 0
        %1621 = vmatpush.bf16.msra.mxu0 0
        %1622 = vmatpush.bf16.msra.mxu0 0
        %1623 = vmatpush.bf16.msra.mxu0 0
        %1624 = vmatpush.bf16.msra.mxu0 0
        %1625 = vmatpush.bf16.msra.mxu0 %v1616
        %1626 = vmatmul.bf16.gmra.mxu0 %v1568
        %v1627 = vpop.f32.mrf.mxu0
        %v1628 = vadd.f32 0.0, %v1627
        %v1629 = vpop.f32.mrf.mxu0
        %v1630 = vadd.f32 0.0, %v1629
        %1631 = vmatmul.bf16.gmra.mxu0 %v1571
        %v1632 = vpop.f32.mrf.mxu0
        %v1633 = vadd.f32 0.0, %v1632
        %v1634 = vpop.f32.mrf.mxu0
        %v1635 = vadd.f32 0.0, %v1634
        %1636 = vmatmul.bf16.gmra.mxu0 %v1574
        %v1637 = vpop.f32.mrf.mxu0
        %v1638 = vadd.f32 0.0, %v1637
        %v1639 = vpop.f32.mrf.mxu0
        %v1640 = vadd.f32 0.0, %v1639
        %1641 = vmatmul.bf16.gmra.mxu0 %v1577
        %v1642 = vpop.f32.mrf.mxu0
        %v1643 = vadd.f32 0.0, %v1642
        %v1644 = vpop.f32.mrf.mxu0
        %v1645 = vadd.f32 0.0, %v1644
        %1646 = vmatmul.bf16.gmra.mxu0 %v1580
        %v1647 = vpop.f32.mrf.mxu0
        %v1648 = vadd.f32 0.0, %v1647
        %v1649 = vpop.f32.mrf.mxu0
        %v1650 = vadd.f32 0.0, %v1649
        %1651 = vmatmul.bf16.gmra.mxu0 %v1583
        %v1652 = vpop.f32.mrf.mxu0
        %v1653 = vadd.f32 0.0, %v1652
        %v1654 = vpop.f32.mrf.mxu0
        %v1655 = vadd.f32 0.0, %v1654
        %1656 = vmatmul.bf16.gmra.mxu0 %v1586
        %v1657 = vpop.f32.mrf.mxu0
        %v1658 = vadd.f32 0.0, %v1657
        %v1659 = vpop.f32.mrf.mxu0
        %v1660 = vadd.f32 0.0, %v1659
        %1661 = vmatmul.bf16.gmra.mxu0 %v1589
        %v1662 = vpop.f32.mrf.mxu0
        %v1663 = vadd.f32 0.0, %v1662
        %v1664 = vpop.f32.mrf.mxu0
        %v1665 = vadd.f32 0.0, %v1664
        %1666 = vmatmul.bf16.gmra.mxu0 %v1592
        %v1667 = vpop.f32.mrf.mxu0
        %v1668 = vadd.f32 0.0, %v1667
        %v1669 = vpop.f32.mrf.mxu0
        %v1670 = vadd.f32 0.0, %v1669
        %1671 = vmatmul.bf16.gmra.mxu0 %v1595
        %v1672 = vpop.f32.mrf.mxu0
        %v1673 = vadd.f32 0.0, %v1672
        %v1674 = vpop.f32.mrf.mxu0
        %v1675 = vadd.f32 0.0, %v1674
        %1676 = vmatmul.bf16.gmra.mxu0 %v1598
        %v1677 = vpop.f32.mrf.mxu0
        %v1678 = vadd.f32 0.0, %v1677
        %v1679 = vpop.f32.mrf.mxu0
        %v1680 = vadd.f32 0.0, %v1679
        %1681 = vmatmul.bf16.gmra.mxu0 %v1601
        %v1682 = vpop.f32.mrf.mxu0
        %v1683 = vadd.f32 0.0, %v1682
        %v1684 = vpop.f32.mrf.mxu0
        %v1685 = vadd.f32 0.0, %v1684
        %1686 = vmatmul.bf16.gmra.mxu0 %v1604
        %v1687 = vpop.f32.mrf.mxu0
        %v1688 = vadd.f32 0.0, %v1687
        %v1689 = vpop.f32.mrf.mxu0
        %v1690 = vadd.f32 0.0, %v1689
        %1691 = vmatmul.bf16.gmra.mxu0 %v1607
        %v1692 = vpop.f32.mrf.mxu0
        %v1693 = vadd.f32 0.0, %v1692
        %v1694 = vpop.f32.mrf.mxu0
        %v1695 = vadd.f32 0.0, %v1694
        %1696 = vmatmul.bf16.gmra.mxu0 %v1610
        %v1697 = vpop.f32.mrf.mxu0
        %v1698 = vadd.f32 0.0, %v1697
        %v1699 = vpop.f32.mrf.mxu0
        %v1700 = vadd.f32 0.0, %v1699
        %1701 = vmatmul.bf16.gmra.mxu0 %v1613
        %v1702 = vpop.f32.mrf.mxu0
        %v1703 = vadd.f32 0.0, %v1702
        %v1704 = vpop.f32.mrf.mxu0
        %v1705 = vadd.f32 0.0, %v1704
        %1706 = vdwg.mxu0
        %v1707 = vadd.f32 %v1484, %v1628
        %v1708 = vadd.f32 %v1485, %v1630
        %v1709 = vadd.f32 %v1486, %v1633
        %v1710 = vadd.f32 %v1487, %v1635
        %v1711 = vadd.f32 %v1488, %v1638
        %v1712 = vadd.f32 %v1489, %v1640
        %v1713 = vadd.f32 %v1490, %v1643
        %v1714 = vadd.f32 %v1491, %v1645
        %v1715 = vadd.f32 %v1492, %v1648
        %v1716 = vadd.f32 %v1493, %v1650
        %v1717 = vadd.f32 %v1494, %v1653
        %v1718 = vadd.f32 %v1495, %v1655
        %v1719 = vadd.f32 %v1496, %v1658
        %v1720 = vadd.f32 %v1497, %v1660
        %v1721 = vadd.f32 %v1498, %v1663
        %v1722 = vadd.f32 %v1499, %v1665
        %v1723 = vadd.f32 %v1500, %v1668
        %v1724 = vadd.f32 %v1501, %v1670
        %v1725 = vadd.f32 %v1502, %v1673
        %v1726 = vadd.f32 %v1503, %v1675
        %v1727 = vadd.f32 %v1504, %v1678
        %v1728 = vadd.f32 %v1505, %v1680
        %v1729 = vadd.f32 %v1506, %v1683
        %v1730 = vadd.f32 %v1507, %v1685
        %v1731 = vadd.f32 %v1508, %v1688
        %v1732 = vadd.f32 %v1509, %v1690
        %v1733 = vadd.f32 %v1510, %v1693
        %v1734 = vadd.f32 %v1511, %v1695
        %v1735 = vadd.f32 %v1512, %v1698
        %v1736 = vadd.f32 %v1513, %v1700
        %v1737 = vadd.f32 %v1514, %v1703
        %v1738 = vadd.f32 %v1515, %v1705
        %v1739 = vld [vmem:[%s1516 + $0x1] sm:$0xff]
        %v1740 = vld [vmem:[%s1516 + $0x9] sm:$0xff]
        %v1741 = vld [vmem:[%s1516 + $0x19] sm:$0xff]
        %v1742 = vld [vmem:[%s1516 + $0x21] sm:$0xff]
        %v1743 = vld [vmem:[%s1516 + $0x31] sm:$0xff]
        %v1744 = vld [vmem:[%s1516 + $0x39] sm:$0xff]
        %v1745 = vld [vmem:[%s1516 + $0x49] sm:$0xff]
        %v1746 = vld [vmem:[%s1516 + $0x51] sm:$0xff]
        %v1747 = vld [vmem:[%s1516 + $0x61] sm:$0xff]
        %v1748 = vld [vmem:[%s1516 + $0x69] sm:$0xff]
        %v1749 = vld [vmem:[%s1516 + $0x79] sm:$0xff]
        %v1750 = vld [vmem:[%s1516 + $0x81] sm:$0xff]
        %v1751 = vld [vmem:[%s1516 + $0x91] sm:$0xff]
        %v1752 = vld [vmem:[%s1516 + $0x99] sm:$0xff]
        %v1753 = vld [vmem:[%s1516 + $0xa9] sm:$0xff]
        %v1754 = vld [vmem:[%s1516 + $0xb1] sm:$0xff]
        %v1755 = vld [vmem:[%s1516 + $0xc1] sm:$0xff]
        %v1756 = vld [vmem:[%s1516 + $0xc9] sm:$0xff]
        %v1757 = vld [vmem:[%s1516 + $0xd9] sm:$0xff]
        %v1758 = vld [vmem:[%s1516 + $0xe1] sm:$0xff]
        %v1759 = vld [vmem:[%s1516 + $0xf1] sm:$0xff]
        %v1760 = vld [vmem:[%s1516 + $0xf9] sm:$0xff]
        %v1761 = vld [vmem:[%s1516 + $0x109] sm:$0xff]
        %v1762 = vld [vmem:[%s1516 + $0x111] sm:$0xff]
        %v1763 = vld [vmem:[%s1516 + $0x121] sm:$0xff]
        %v1764 = vld [vmem:[%s1516 + $0x129] sm:$0xff]
        %v1765 = vld [vmem:[%s1516 + $0x139] sm:$0xff]
        %v1766 = vld [vmem:[%s1516 + $0x141] sm:$0xff]
        %v1767 = vld [vmem:[%s1516 + $0x151] sm:$0xff]
        %v1768 = vld [vmem:[%s1516 + $0x159] sm:$0xff]
        %v1769 = vld [vmem:[%s1516 + $0x169] sm:$0xff]
        %v1770 = vld [vmem:[%s1516 + $0x171] sm:$0xff]
        %v1771 = vpack.c.bf16 %v1740, %v1739
        %v1772 = vpack.c.bf16 %v1742, %v1741
        %v1773 = vpack.c.bf16 %v1744, %v1743
        %v1774 = vpack.c.bf16 %v1746, %v1745
        %v1775 = vpack.c.bf16 %v1748, %v1747
        %v1776 = vpack.c.bf16 %v1750, %v1749
        %v1777 = vpack.c.bf16 %v1752, %v1751
        %v1778 = vpack.c.bf16 %v1754, %v1753
        %v1779 = vpack.c.bf16 %v1756, %v1755
        %v1780 = vpack.c.bf16 %v1758, %v1757
        %v1781 = vpack.c.bf16 %v1760, %v1759
        %v1782 = vpack.c.bf16 %v1762, %v1761
        %v1783 = vpack.c.bf16 %v1764, %v1763
        %v1784 = vpack.c.bf16 %v1766, %v1765
        %v1785 = vpack.c.bf16 %v1768, %v1767
        %v1786 = vpack.c.bf16 %v1770, %v1769
        %v1788 = vshrl.u32 %v1565, 16
        %v1790 = vrot.slane %v1788, 2
        %v1791 = vshll.u32 %v1565, 16
        %v1793 = vrot.slane %v1791, 3
        %v1794 = vor.u32 %v1790, %v1793
        %v1796 = vsel %vm326, %v1771, 0
        %v1799 = vsel %vm326, %v1772, 0
        %v1802 = vsel %vm326, %v1773, 0
        %v1805 = vsel %vm326, %v1774, 0
        %v1808 = vsel %vm326, %v1775, 0
        %v1811 = vsel %vm326, %v1776, 0
        %v1814 = vsel %vm326, %v1777, 0
        %v1817 = vsel %vm326, %v1778, 0
        %v1820 = vsel %vm326, %v1779, 0
        %v1823 = vsel %vm326, %v1780, 0
        %v1826 = vsel %vm326, %v1781, 0
        %v1829 = vsel %vm326, %v1782, 0
        %v1832 = vsel %vm326, %v1783, 0
        %v1835 = vsel %vm326, %v1784, 0
        %v1838 = vsel %vm326, %v1785, 0
        %v1841 = vsel %vm326, %v1786, 0
        %v1844 = vand.u32 %v1794, %v378
        %1846 = vmatpush.bf16.msra.mxu0 0
        %1847 = vmatpush.bf16.msra.mxu0 0
        %1848 = vmatpush.bf16.msra.mxu0 0
        %1849 = vmatpush.bf16.msra.mxu0 0
        %1850 = vmatpush.bf16.msra.mxu0 0
        %1851 = vmatpush.bf16.msra.mxu0 0
        %1852 = vmatpush.bf16.msra.mxu0 0
        %1853 = vmatpush.bf16.msra.mxu0 %v1844
        %1854 = vmatmul.bf16.gmra.mxu0 %v1796
        %v1855 = vpop.f32.mrf.mxu0
        %v1856 = vadd.f32 0.0, %v1855
        %v1857 = vpop.f32.mrf.mxu0
        %v1858 = vadd.f32 0.0, %v1857
        %1859 = vmatmul.bf16.gmra.mxu0 %v1799
        %v1860 = vpop.f32.mrf.mxu0
        %v1861 = vadd.f32 0.0, %v1860
        %v1862 = vpop.f32.mrf.mxu0
        %v1863 = vadd.f32 0.0, %v1862
        %1864 = vmatmul.bf16.gmra.mxu0 %v1802
        %v1865 = vpop.f32.mrf.mxu0
        %v1866 = vadd.f32 0.0, %v1865
        %v1867 = vpop.f32.mrf.mxu0
        %v1868 = vadd.f32 0.0, %v1867
        %1869 = vmatmul.bf16.gmra.mxu0 %v1805
        %v1870 = vpop.f32.mrf.mxu0
        %v1871 = vadd.f32 0.0, %v1870
        %v1872 = vpop.f32.mrf.mxu0
        %v1873 = vadd.f32 0.0, %v1872
        %1874 = vmatmul.bf16.gmra.mxu0 %v1808
        %v1875 = vpop.f32.mrf.mxu0
        %v1876 = vadd.f32 0.0, %v1875
        %v1877 = vpop.f32.mrf.mxu0
        %v1878 = vadd.f32 0.0, %v1877
        %1879 = vmatmul.bf16.gmra.mxu0 %v1811
        %v1880 = vpop.f32.mrf.mxu0
        %v1881 = vadd.f32 0.0, %v1880
        %v1882 = vpop.f32.mrf.mxu0
        %v1883 = vadd.f32 0.0, %v1882
        %1884 = vmatmul.bf16.gmra.mxu0 %v1814
        %v1885 = vpop.f32.mrf.mxu0
        %v1886 = vadd.f32 0.0, %v1885
        %v1887 = vpop.f32.mrf.mxu0
        %v1888 = vadd.f32 0.0, %v1887
        %1889 = vmatmul.bf16.gmra.mxu0 %v1817
        %v1890 = vpop.f32.mrf.mxu0
        %v1891 = vadd.f32 0.0, %v1890
        %v1892 = vpop.f32.mrf.mxu0
        %v1893 = vadd.f32 0.0, %v1892
        %1894 = vmatmul.bf16.gmra.mxu0 %v1820
        %v1895 = vpop.f32.mrf.mxu0
        %v1896 = vadd.f32 0.0, %v1895
        %v1897 = vpop.f32.mrf.mxu0
        %v1898 = vadd.f32 0.0, %v1897
        %1899 = vmatmul.bf16.gmra.mxu0 %v1823
        %v1900 = vpop.f32.mrf.mxu0
        %v1901 = vadd.f32 0.0, %v1900
        %v1902 = vpop.f32.mrf.mxu0
        %v1903 = vadd.f32 0.0, %v1902
        %1904 = vmatmul.bf16.gmra.mxu0 %v1826
        %v1905 = vpop.f32.mrf.mxu0
        %v1906 = vadd.f32 0.0, %v1905
        %v1907 = vpop.f32.mrf.mxu0
        %v1908 = vadd.f32 0.0, %v1907
        %1909 = vmatmul.bf16.gmra.mxu0 %v1829
        %v1910 = vpop.f32.mrf.mxu0
        %v1911 = vadd.f32 0.0, %v1910
        %v1912 = vpop.f32.mrf.mxu0
        %v1913 = vadd.f32 0.0, %v1912
        %1914 = vmatmul.bf16.gmra.mxu0 %v1832
        %v1915 = vpop.f32.mrf.mxu0
        %v1916 = vadd.f32 0.0, %v1915
        %v1917 = vpop.f32.mrf.mxu0
        %v1918 = vadd.f32 0.0, %v1917
        %1919 = vmatmul.bf16.gmra.mxu0 %v1835
        %v1920 = vpop.f32.mrf.mxu0
        %v1921 = vadd.f32 0.0, %v1920
        %v1922 = vpop.f32.mrf.mxu0
        %v1923 = vadd.f32 0.0, %v1922
        %1924 = vmatmul.bf16.gmra.mxu0 %v1838
        %v1925 = vpop.f32.mrf.mxu0
        %v1926 = vadd.f32 0.0, %v1925
        %v1927 = vpop.f32.mrf.mxu0
        %v1928 = vadd.f32 0.0, %v1927
        %1929 = vmatmul.bf16.gmra.mxu0 %v1841
        %v1930 = vpop.f32.mrf.mxu0
        %v1931 = vadd.f32 0.0, %v1930
        %v1932 = vpop.f32.mrf.mxu0
        %v1933 = vadd.f32 0.0, %v1932
        %1934 = vdwg.mxu0
        %v1935 = vadd.f32 %v1707, %v1856
        %v1936 = vadd.f32 %v1708, %v1858
        %v1937 = vadd.f32 %v1709, %v1861
        %v1938 = vadd.f32 %v1710, %v1863
        %v1939 = vadd.f32 %v1711, %v1866
        %v1940 = vadd.f32 %v1712, %v1868
        %v1941 = vadd.f32 %v1713, %v1871
        %v1942 = vadd.f32 %v1714, %v1873
        %v1943 = vadd.f32 %v1715, %v1876
        %v1944 = vadd.f32 %v1716, %v1878
        %v1945 = vadd.f32 %v1717, %v1881
        %v1946 = vadd.f32 %v1718, %v1883
        %v1947 = vadd.f32 %v1719, %v1886
        %v1948 = vadd.f32 %v1720, %v1888
        %v1949 = vadd.f32 %v1721, %v1891
        %v1950 = vadd.f32 %v1722, %v1893
        %v1951 = vadd.f32 %v1723, %v1896
        %v1952 = vadd.f32 %v1724, %v1898
        %v1953 = vadd.f32 %v1725, %v1901
        %v1954 = vadd.f32 %v1726, %v1903
        %v1955 = vadd.f32 %v1727, %v1906
        %v1956 = vadd.f32 %v1728, %v1908
        %v1957 = vadd.f32 %v1729, %v1911
        %v1958 = vadd.f32 %v1730, %v1913
        %v1959 = vadd.f32 %v1731, %v1916
        %v1960 = vadd.f32 %v1732, %v1918
        %v1961 = vadd.f32 %v1733, %v1921
        %v1962 = vadd.f32 %v1734, %v1923
        %v1963 = vadd.f32 %v1735, %v1926
        %v1964 = vadd.f32 %v1736, %v1928
        %v1965 = vadd.f32 %v1737, %v1931
        %v1966 = vadd.f32 %v1738, %v1933
        %v1967 = vld [vmem:[%s1516 + $0x2] sm:$0xff]
        %v1968 = vld [vmem:[%s1516 + $0xa] sm:$0xff]
        %v1969 = vld [vmem:[%s1516 + $0x1a] sm:$0xff]
        %v1970 = vld [vmem:[%s1516 + $0x22] sm:$0xff]
        %v1971 = vld [vmem:[%s1516 + $0x32] sm:$0xff]
        %v1972 = vld [vmem:[%s1516 + $0x3a] sm:$0xff]
        %v1973 = vld [vmem:[%s1516 + $0x4a] sm:$0xff]
        %v1974 = vld [vmem:[%s1516 + $0x52] sm:$0xff]
        %v1975 = vld [vmem:[%s1516 + $0x62] sm:$0xff]
        %v1976 = vld [vmem:[%s1516 + $0x6a] sm:$0xff]
        %v1977 = vld [vmem:[%s1516 + $0x7a] sm:$0xff]
        %v1978 = vld [vmem:[%s1516 + $0x82] sm:$0xff]
        %v1979 = vld [vmem:[%s1516 + $0x92] sm:$0xff]
        %v1980 = vld [vmem:[%s1516 + $0x9a] sm:$0xff]
        %v1981 = vld [vmem:[%s1516 + $0xaa] sm:$0xff]
        %v1982 = vld [vmem:[%s1516 + $0xb2] sm:$0xff]
        %v1983 = vld [vmem:[%s1516 + $0xc2] sm:$0xff]
        %v1984 = vld [vmem:[%s1516 + $0xca] sm:$0xff]
        %v1985 = vld [vmem:[%s1516 + $0xda] sm:$0xff]
        %v1986 = vld [vmem:[%s1516 + $0xe2] sm:$0xff]
        %v1987 = vld [vmem:[%s1516 + $0xf2] sm:$0xff]
        %v1988 = vld [vmem:[%s1516 + $0xfa] sm:$0xff]
        %v1989 = vld [vmem:[%s1516 + $0x10a] sm:$0xff]
        %v1990 = vld [vmem:[%s1516 + $0x112] sm:$0xff]
        %v1991 = vld [vmem:[%s1516 + $0x122] sm:$0xff]
        %v1992 = vld [vmem:[%s1516 + $0x12a] sm:$0xff]
        %v1993 = vld [vmem:[%s1516 + $0x13a] sm:$0xff]
        %v1994 = vld [vmem:[%s1516 + $0x142] sm:$0xff]
        %v1995 = vld [vmem:[%s1516 + $0x152] sm:$0xff]
        %v1996 = vld [vmem:[%s1516 + $0x15a] sm:$0xff]
        %v1997 = vld [vmem:[%s1516 + $0x16a] sm:$0xff]
        %v1998 = vld [vmem:[%s1516 + $0x172] sm:$0xff]
        %v1999 = vpack.c.bf16 %v1968, %v1967
        %v2000 = vpack.c.bf16 %v1970, %v1969
        %v2001 = vpack.c.bf16 %v1972, %v1971
        %v2002 = vpack.c.bf16 %v1974, %v1973
        %v2003 = vpack.c.bf16 %v1976, %v1975
        %v2004 = vpack.c.bf16 %v1978, %v1977
        %v2005 = vpack.c.bf16 %v1980, %v1979
        %v2006 = vpack.c.bf16 %v1982, %v1981
        %v2007 = vpack.c.bf16 %v1984, %v1983
        %v2008 = vpack.c.bf16 %v1986, %v1985
        %v2009 = vpack.c.bf16 %v1988, %v1987
        %v2010 = vpack.c.bf16 %v1990, %v1989
        %v2011 = vpack.c.bf16 %v1992, %v1991
        %v2012 = vpack.c.bf16 %v1994, %v1993
        %v2013 = vpack.c.bf16 %v1996, %v1995
        %v2014 = vpack.c.bf16 %v1998, %v1997
        %v2016 = vsel %vm326, %v1999, 0
        %v2019 = vsel %vm326, %v2000, 0
        %v2022 = vsel %vm326, %v2001, 0
        %v2025 = vsel %vm326, %v2002, 0
        %v2028 = vsel %vm326, %v2003, 0
        %v2031 = vsel %vm326, %v2004, 0
        %v2034 = vsel %vm326, %v2005, 0
        %v2037 = vsel %vm326, %v2006, 0
        %v2040 = vsel %vm326, %v2007, 0
        %v2043 = vsel %vm326, %v2008, 0
        %v2046 = vsel %vm326, %v2009, 0
        %v2049 = vsel %vm326, %v2010, 0
        %v2052 = vsel %vm326, %v2011, 0
        %v2055 = vsel %vm326, %v2012, 0
        %v2058 = vsel %vm326, %v2013, 0
        %v2061 = vsel %vm326, %v2014, 0
        %v2064 = vand.u32 %v218, %v378
        %2066 = vmatpush.bf16.msra.mxu0 0
        %2067 = vmatpush.bf16.msra.mxu0 0
        %2068 = vmatpush.bf16.msra.mxu0 0
        %2069 = vmatpush.bf16.msra.mxu0 0
        %2070 = vmatpush.bf16.msra.mxu0 0
        %2071 = vmatpush.bf16.msra.mxu0 0
        %2072 = vmatpush.bf16.msra.mxu0 0
        %2073 = vmatpush.bf16.msra.mxu0 %v2064
        %2074 = vmatmul.bf16.gmra.mxu0 %v2016
        %v2075 = vpop.f32.mrf.mxu0
        %v2076 = vadd.f32 0.0, %v2075
        %v2077 = vpop.f32.mrf.mxu0
        %v2078 = vadd.f32 0.0, %v2077
        %2079 = vmatmul.bf16.gmra.mxu0 %v2019
        %v2080 = vpop.f32.mrf.mxu0
        %v2081 = vadd.f32 0.0, %v2080
        %v2082 = vpop.f32.mrf.mxu0
        %v2083 = vadd.f32 0.0, %v2082
        %2084 = vmatmul.bf16.gmra.mxu0 %v2022
        %v2085 = vpop.f32.mrf.mxu0
        %v2086 = vadd.f32 0.0, %v2085
        %v2087 = vpop.f32.mrf.mxu0
        %v2088 = vadd.f32 0.0, %v2087
        %2089 = vmatmul.bf16.gmra.mxu0 %v2025
        %v2090 = vpop.f32.mrf.mxu0
        %v2091 = vadd.f32 0.0, %v2090
        %v2092 = vpop.f32.mrf.mxu0
        %v2093 = vadd.f32 0.0, %v2092
        %2094 = vmatmul.bf16.gmra.mxu0 %v2028
        %v2095 = vpop.f32.mrf.mxu0
        %v2096 = vadd.f32 0.0, %v2095
        %v2097 = vpop.f32.mrf.mxu0
        %v2098 = vadd.f32 0.0, %v2097
        %2099 = vmatmul.bf16.gmra.mxu0 %v2031
        %v2100 = vpop.f32.mrf.mxu0
        %v2101 = vadd.f32 0.0, %v2100
        %v2102 = vpop.f32.mrf.mxu0
        %v2103 = vadd.f32 0.0, %v2102
        %2104 = vmatmul.bf16.gmra.mxu0 %v2034
        %v2105 = vpop.f32.mrf.mxu0
        %v2106 = vadd.f32 0.0, %v2105
        %v2107 = vpop.f32.mrf.mxu0
        %v2108 = vadd.f32 0.0, %v2107
        %2109 = vmatmul.bf16.gmra.mxu0 %v2037
        %v2110 = vpop.f32.mrf.mxu0
        %v2111 = vadd.f32 0.0, %v2110
        %v2112 = vpop.f32.mrf.mxu0
        %v2113 = vadd.f32 0.0, %v2112
        %2114 = vmatmul.bf16.gmra.mxu0 %v2040
        %v2115 = vpop.f32.mrf.mxu0
        %v2116 = vadd.f32 0.0, %v2115
        %v2117 = vpop.f32.mrf.mxu0
        %v2118 = vadd.f32 0.0, %v2117
        %2119 = vmatmul.bf16.gmra.mxu0 %v2043
        %v2120 = vpop.f32.mrf.mxu0
        %v2121 = vadd.f32 0.0, %v2120
        %v2122 = vpop.f32.mrf.mxu0
        %v2123 = vadd.f32 0.0, %v2122
        %2124 = vmatmul.bf16.gmra.mxu0 %v2046
        %v2125 = vpop.f32.mrf.mxu0
        %v2126 = vadd.f32 0.0, %v2125
        %v2127 = vpop.f32.mrf.mxu0
        %v2128 = vadd.f32 0.0, %v2127
        %2129 = vmatmul.bf16.gmra.mxu0 %v2049
        %v2130 = vpop.f32.mrf.mxu0
        %v2131 = vadd.f32 0.0, %v2130
        %v2132 = vpop.f32.mrf.mxu0
        %v2133 = vadd.f32 0.0, %v2132
        %2134 = vmatmul.bf16.gmra.mxu0 %v2052
        %v2135 = vpop.f32.mrf.mxu0
        %v2136 = vadd.f32 0.0, %v2135
        %v2137 = vpop.f32.mrf.mxu0
        %v2138 = vadd.f32 0.0, %v2137
        %2139 = vmatmul.bf16.gmra.mxu0 %v2055
        %v2140 = vpop.f32.mrf.mxu0
        %v2141 = vadd.f32 0.0, %v2140
        %v2142 = vpop.f32.mrf.mxu0
        %v2143 = vadd.f32 0.0, %v2142
        %2144 = vmatmul.bf16.gmra.mxu0 %v2058
        %v2145 = vpop.f32.mrf.mxu0
        %v2146 = vadd.f32 0.0, %v2145
        %v2147 = vpop.f32.mrf.mxu0
        %v2148 = vadd.f32 0.0, %v2147
        %2149 = vmatmul.bf16.gmra.mxu0 %v2061
        %v2150 = vpop.f32.mrf.mxu0
        %v2151 = vadd.f32 0.0, %v2150
        %v2152 = vpop.f32.mrf.mxu0
        %v2153 = vadd.f32 0.0, %v2152
        %2154 = vdwg.mxu0
        %v2155 = vadd.f32 %v1935, %v2076
        %v2156 = vadd.f32 %v1936, %v2078
        %v2157 = vadd.f32 %v1937, %v2081
        %v2158 = vadd.f32 %v1938, %v2083
        %v2159 = vadd.f32 %v1939, %v2086
        %v2160 = vadd.f32 %v1940, %v2088
        %v2161 = vadd.f32 %v1941, %v2091
        %v2162 = vadd.f32 %v1942, %v2093
        %v2163 = vadd.f32 %v1943, %v2096
        %v2164 = vadd.f32 %v1944, %v2098
        %v2165 = vadd.f32 %v1945, %v2101
        %v2166 = vadd.f32 %v1946, %v2103
        %v2167 = vadd.f32 %v1947, %v2106
        %v2168 = vadd.f32 %v1948, %v2108
        %v2169 = vadd.f32 %v1949, %v2111
        %v2170 = vadd.f32 %v1950, %v2113
        %v2171 = vadd.f32 %v1951, %v2116
        %v2172 = vadd.f32 %v1952, %v2118
        %v2173 = vadd.f32 %v1953, %v2121
        %v2174 = vadd.f32 %v1954, %v2123
        %v2175 = vadd.f32 %v1955, %v2126
        %v2176 = vadd.f32 %v1956, %v2128
        %v2177 = vadd.f32 %v1957, %v2131
        %v2178 = vadd.f32 %v1958, %v2133
        %v2179 = vadd.f32 %v1959, %v2136
        %v2180 = vadd.f32 %v1960, %v2138
        %v2181 = vadd.f32 %v1961, %v2141
        %v2182 = vadd.f32 %v1962, %v2143
        %v2183 = vadd.f32 %v1963, %v2146
        %v2184 = vadd.f32 %v1964, %v2148
        %v2185 = vadd.f32 %v1965, %v2151
        %v2186 = vadd.f32 %v1966, %v2153
        %v2187 = vld [vmem:[%s213] sm:$0x1]
        %v2189 = vperm.slane %v2187, 0
        %v2191 = vadd.f32 %v2155, %v2189
        %v2192 = vadd.f32 %v2156, %v2189
        %v2193 = vadd.f32 %v2157, %v2189
        %v2194 = vadd.f32 %v2158, %v2189
        %v2195 = vadd.f32 %v2159, %v2189
        %v2196 = vadd.f32 %v2160, %v2189
        %v2197 = vadd.f32 %v2161, %v2189
        %v2198 = vadd.f32 %v2162, %v2189
        %v2199 = vadd.f32 %v2163, %v2189
        %v2200 = vadd.f32 %v2164, %v2189
        %v2201 = vadd.f32 %v2165, %v2189
        %v2202 = vadd.f32 %v2166, %v2189
        %v2203 = vadd.f32 %v2167, %v2189
        %v2204 = vadd.f32 %v2168, %v2189
        %v2205 = vadd.f32 %v2169, %v2189
        %v2206 = vadd.f32 %v2170, %v2189
        %v2207 = vadd.f32 %v2171, %v2189
        %v2208 = vadd.f32 %v2172, %v2189
        %v2209 = vadd.f32 %v2173, %v2189
        %v2210 = vadd.f32 %v2174, %v2189
        %v2211 = vadd.f32 %v2175, %v2189
        %v2212 = vadd.f32 %v2176, %v2189
        %v2213 = vadd.f32 %v2177, %v2189
        %v2214 = vadd.f32 %v2178, %v2189
        %v2215 = vadd.f32 %v2179, %v2189
        %v2216 = vadd.f32 %v2180, %v2189
        %v2217 = vadd.f32 %v2181, %v2189
        %v2218 = vadd.f32 %v2182, %v2189
        %v2219 = vadd.f32 %v2183, %v2189
        %v2220 = vadd.f32 %v2184, %v2189
        %v2221 = vadd.f32 %v2185, %v2189
        %v2222 = vadd.f32 %v2186, %v2189
        %v2223 = vpack.c.bf16 %v2191, %v2191
        %v2224 = vpack.c.bf16 %v2192, %v2192
        %v2225 = vpack.c.bf16 %v2193, %v2193
        %v2226 = vpack.c.bf16 %v2194, %v2194
        %v2227 = vpack.c.bf16 %v2195, %v2195
        %v2228 = vpack.c.bf16 %v2196, %v2196
        %v2229 = vpack.c.bf16 %v2197, %v2197
        %v2230 = vpack.c.bf16 %v2198, %v2198
        %v2231 = vpack.c.bf16 %v2199, %v2199
        %v2232 = vpack.c.bf16 %v2200, %v2200
        %v2233 = vpack.c.bf16 %v2201, %v2201
        %v2234 = vpack.c.bf16 %v2202, %v2202
        %v2235 = vpack.c.bf16 %v2203, %v2203
        %v2236 = vpack.c.bf16 %v2204, %v2204
        %v2237 = vpack.c.bf16 %v2205, %v2205
        %v2238 = vpack.c.bf16 %v2206, %v2206
        %v2239 = vpack.c.bf16 %v2207, %v2207
        %v2240 = vpack.c.bf16 %v2208, %v2208
        %v2241 = vpack.c.bf16 %v2209, %v2209
        %v2242 = vpack.c.bf16 %v2210, %v2210
        %v2243 = vpack.c.bf16 %v2211, %v2211
        %v2244 = vpack.c.bf16 %v2212, %v2212
        %v2245 = vpack.c.bf16 %v2213, %v2213
        %v2246 = vpack.c.bf16 %v2214, %v2214
        %v2247 = vpack.c.bf16 %v2215, %v2215
        %v2248 = vpack.c.bf16 %v2216, %v2216
        %v2249 = vpack.c.bf16 %v2217, %v2217
        %v2250 = vpack.c.bf16 %v2218, %v2218
        %v2251 = vpack.c.bf16 %v2219, %v2219
        %v2252 = vpack.c.bf16 %v2220, %v2220
        %v2253 = vpack.c.bf16 %v2221, %v2221
        %v2254 = vpack.c.bf16 %v2222, %v2222
        %vm2255 = vcmask 257024
        %2256 = vst.msk [vmem:[%s201] sm:$0xf] %vm2255, %v2223
        %2257 = vst.msk [vmem:[%s201 + $0x4] sm:$0xf] %vm2255, %v2224
        %2258 = vst.msk [vmem:[%s201 + $0x8] sm:$0xf] %vm2255, %v2225
        %2259 = vst.msk [vmem:[%s201 + $0xc] sm:$0xf] %vm2255, %v2226
        %2260 = vst.msk [vmem:[%s201 + $0x10] sm:$0xf] %vm2255, %v2227
        %2261 = vst.msk [vmem:[%s201 + $0x14] sm:$0xf] %vm2255, %v2228
        %2262 = vst.msk [vmem:[%s201 + $0x18] sm:$0xf] %vm2255, %v2229
        %2263 = vst.msk [vmem:[%s201 + $0x1c] sm:$0xf] %vm2255, %v2230
        %2264 = vst.msk [vmem:[%s201 + $0x20] sm:$0xf] %vm2255, %v2231
        %2265 = vst.msk [vmem:[%s201 + $0x24] sm:$0xf] %vm2255, %v2232
        %2266 = vst.msk [vmem:[%s201 + $0x28] sm:$0xf] %vm2255, %v2233
        %2267 = vst.msk [vmem:[%s201 + $0x2c] sm:$0xf] %vm2255, %v2234
        %2268 = vst.msk [vmem:[%s201 + $0x30] sm:$0xf] %vm2255, %v2235
        %2269 = vst.msk [vmem:[%s201 + $0x34] sm:$0xf] %vm2255, %v2236
        %2270 = vst.msk [vmem:[%s201 + $0x38] sm:$0xf] %vm2255, %v2237
        %2271 = vst.msk [vmem:[%s201 + $0x3c] sm:$0xf] %vm2255, %v2238
        %2272 = vst.msk [vmem:[%s201 + $0x40] sm:$0xf] %vm2255, %v2239
        %2273 = vst.msk [vmem:[%s201 + $0x44] sm:$0xf] %vm2255, %v2240
        %2274 = vst.msk [vmem:[%s201 + $0x48] sm:$0xf] %vm2255, %v2241
        %2275 = vst.msk [vmem:[%s201 + $0x4c] sm:$0xf] %vm2255, %v2242
        %2276 = vst.msk [vmem:[%s201 + $0x50] sm:$0xf] %vm2255, %v2243
        %2277 = vst.msk [vmem:[%s201 + $0x54] sm:$0xf] %vm2255, %v2244
        %2278 = vst.msk [vmem:[%s201 + $0x58] sm:$0xf] %vm2255, %v2245
        %2279 = vst.msk [vmem:[%s201 + $0x5c] sm:$0xf] %vm2255, %v2246
        %2280 = vst.msk [vmem:[%s201 + $0x60] sm:$0xf] %vm2255, %v2247
        %2281 = vst.msk [vmem:[%s201 + $0x64] sm:$0xf] %vm2255, %v2248
        %2282 = vst.msk [vmem:[%s201 + $0x68] sm:$0xf] %vm2255, %v2249
        %2283 = vst.msk [vmem:[%s201 + $0x6c] sm:$0xf] %vm2255, %v2250
        %2284 = vst.msk [vmem:[%s201 + $0x70] sm:$0xf] %vm2255, %v2251
        %2285 = vst.msk [vmem:[%s201 + $0x74] sm:$0xf] %vm2255, %v2252
        %2286 = vst.msk [vmem:[%s201 + $0x78] sm:$0xf] %vm2255, %v2253
        %2287 = vst.msk [vmem:[%s201 + $0x7c] sm:$0xf] %vm2255, %v2254
        %s2288 = sand.u32 %s117, 1
        %s2289 = scalar_lea.sflag [#allocation3], %s2288
        %s2290 = sand.u32 %s117, 1
        %s2291 = smul.addr %s2290, 128
        %s2292 = scalar_lea.vmem [#allocation2], %s2291
        // Predicated region
        $region33: #{tpu_custom_call.1} parent=31 // pred_check
          %p2293 = pneg %p127
        $region34: #{tpu_custom_call.1} parent=31 // pred_check_branch
          %2295 = sbr.rel (%p2293) target = $region36
        $region35: #{tpu_custom_call.1} parent=31 // pred_region
          %2297 = vsyncadd %s2289, 0
          %s2298 = smul.addr %s21, 32
          %s2299 = sadd.s32 %s22, %s2298
          %s2300 = smul.addr %s2299, 4
          %s2301 = scalar_lea.hbm %s3, %s2300
          %s2302 = sshll.u32 %s2292, 4
          %s2303 = int_to_ptr.vmem [resolvable:$true] %s2302
          %s2304 = sshll.u32 %s2301, 4
          %s2305 = int_to_ptr.hbm [resolvable:$true] %s2304
          %2310 = dma.vmem_to_hbm [thread:$0]  %s2303, 2048, %s2305, %s2289, 64, 64, 4
        $region36: #{tpu_custom_call.1} parent=31 // pred_fallthru
          _
      $region32: #{tpu_custom_call.1} parent=5 // pred_fallthru
        _
      %p2311 = scmp.le.s32.totalorder 2, %s12
      // Predicated region
      $region37: #{tpu_custom_call.1} parent=5 // pred_check
        %p2312 = pneg %p2311
      $region38: #{tpu_custom_call.1} parent=5 // pred_check_branch
        %2314 = sbr.rel (%p2312) target = $region40
      $region39: #{tpu_custom_call.1} parent=5 // pred_region
        %s2315 = ssub.s32 %s12, 2
        // Predicated region
        $region41: #{tpu_custom_call.1} parent=39 // pred_check
          %p2316 = pneg %p133
        $region42: #{tpu_custom_call.1} parent=39 // pred_check_branch
          %2318 = sbr.rel (%p2316) target = $region44
        $region43: #{tpu_custom_call.1} parent=39 // pred_region
          %s2319 = sand.u32 %s118, 1
          %s2320 = scalar_lea.sflag [#allocation3], %s2319
          %s2321 = sand.u32 %s118, 1
          %s2322 = smul.addr %s2321, 128
          %s2323 = scalar_lea.vmem [#allocation2], %s2322
          %2325 = dma.done %s2320, 2048
        $region44: #{tpu_custom_call.1} parent=39 // pred_fallthru
          _
      $region40: #{tpu_custom_call.1} parent=5 // pred_fallthru
        _
    $region6: #{tpu_custom_call.1} parent=1 // loop_footer
      %s16 = sadd.s32 1, %s12
    $region7: #{tpu_custom_call.1} parent=1 // loop_footer_branch
      %11 = sbr.rel target = $region3
    $region8: #{tpu_custom_call.1} parent=1 // loop_exit
      _
    %2326 = vsyncpa [#allocation3], 1
    %s2327 = scalar_lea.sflag [#allocation3], 1
    %2328 = vsyncpa %s2327, 1

</llo_original>
